<compile_context>
chip_gen: v5e
topology: v5e:2x2
jax: 0.10.0
libtpu: 0.0.40
codegen_flags: <defaults>
</compile_context>

<pallas_src>
import functools
import math

import jax
import jax.numpy as jnp
from jax.experimental import pallas as pl
from jax.experimental.pallas import tpu as pltpu


_LANE = 128
_SUBLANE = 8


def _round_down(v, m):
    return (v // m) * m


def _round_up(v, m):
    return ((v + m - 1) // m) * m


def _tpu_config():
    """Generation-aware (block_target_bytes, vmem_limit_bytes)."""
    block, limit = 2 * 2**20, 32 * 2**20        # safe everywhere (v5e default)
    try:
        info = pltpu.get_tpu_info()
        vmem = int(getattr(info, "vmem_capacity_bytes", 0) or 0)
        ver = str(getattr(info, "chip_version", "")).lower()
    except Exception:                            # trace-time query only
        vmem, ver = 0, ""
    if vmem and vmem <= 80 * 2**20:
        # v7x-class: 64 MiB physical VMEM, ~3.2 TB/s HBM -> bigger blocks to
        # amortize per-step overhead; double-buffered in+out stays <= ~16 MiB.
        block, limit = 4 * 2**20, 32 * 2**20
    elif "v6" in ver or "6e" in ver:
        # v6e: 128 MiB physical VMEM -> 4 MiB blocks, 64 MiB scoped limit.
        block, limit = 4 * 2**20, 64 * 2**20
    return block, limit


_BLOCK_BYTES, _VMEM_LIMIT_BYTES = _tpu_config()


def _compiler_params(dim_sem):
    return pltpu.CompilerParams(dimension_semantics=dim_sem,
                                vmem_limit_bytes=_VMEM_LIMIT_BYTES)


def _cost(x):
    # Pure data movement: read once, write once.
    return pl.CostEstimate(flops=0, transcendentals=0,
                           bytes_accessed=2 * x.size * x.dtype.itemsize)


# --------------------------------------------------------------------------
# Permutation analysis
# --------------------------------------------------------------------------
def _coalesce(shape, perm):
    """Drop size-1 axes and merge axes that stay adjacent; returns (cshape, cperm)."""
    kept = [i for i in range(len(shape)) if shape[i] != 1]
    if not kept:
        return (), ()
    label = {ax: j for j, ax in enumerate(kept)}
    p = [label[ax] for ax in perm if ax in label]
    s = [shape[ax] for ax in kept]
    groups = [[p[0]]]
    for v in p[1:]:
        if v == groups[-1][-1] + 1:
            groups[-1].append(v)
        else:
            groups.append([v])
    order = sorted(range(len(groups)), key=lambda g: groups[g][0])  # input order
    cshape = tuple(math.prod(s[ax] for ax in groups[g]) for g in order)
    pos = {g: i for i, g in enumerate(order)}
    cperm = tuple(pos[g] for g in range(len(groups)))               # output order
    return cshape, cperm


# --------------------------------------------------------------------------
# Tile selection
# --------------------------------------------------------------------------
def _flat_tiles(B, M, N, itemsize):
    """(bt, tn) for the (B, M, N) -> (B, N*M) lane-dense flat path.

    Output block is (bt, tn*M): bt must be a multiple of 8 or == B; tn is a
    multiple of 128 or == N so tn*M stays 128-aligned whenever tiled.
    Blocks are kept <= _BLOCK_BYTES so double-buffered in+out stays bounded.
    """
    target = _BLOCK_BYTES
    n128 = _round_down(N, _LANE)

    def lane_tile(max_batch):
        if N <= _LANE or max_batch * M * N * itemsize <= target:
            return N
        t = _round_down(max(target // (max_batch * M * itemsize), _LANE), _LANE)
        t = min(t, n128)
        # Prefer >=1 KiB contiguous DMA chunks when that stays within budget.
        min_t = min(n128, _round_up(max(1, 1024 // itemsize), _LANE))
        if max_batch * M * min_t * itemsize <= target:
            t = max(t, min_t)
        return max(t, _LANE)

    bt_full = target // max(1, M * N * itemsize)   # batch rows with tn == N
    if bt_full >= B:
        bt, tn = B, N
    elif B <= _SUBLANE:
        bt = B
        tn = lane_tile(bt)
    elif bt_full >= _SUBLANE:
        bt, tn = _round_down(bt_full, _SUBLANE), N
    else:
        bt = _SUBLANE
        tn = lane_tile(bt)

    # Guarantee >=2 grid steps for non-trivial sizes so BlockSpec
    # double-buffering overlaps DMA and v7x can shard across both TCs.
    if (pl.cdiv(B, bt) * pl.cdiv(N, tn) == 1
            and B * M * N * itemsize > 512 * 1024):
        if bt >= 2 * _SUBLANE:
            bt = _round_down(bt // 2, _SUBLANE)
        elif N >= 2 * _LANE:
            tn = max(_LANE, _round_down(tn // 2, _LANE))
    return bt, tn


def _tiles_3d(B, M, N, itemsize):
    """(bt, tm, tn) for the (B, M, N) -> (B, N, M) path; block <= _BLOCK_BYTES."""
    target = _BLOCK_BYTES
    # tm: output lane dim. Full M when affordable, else a 128-multiple
    # (legal as input sublane tile and as output lane tile).
    if M * _LANE * itemsize <= target:
        tm = M
    else:
        tm = max(_LANE, _round_down(target // (_LANE * itemsize), _LANE))
        tm = min(tm, max(_LANE, _round_down(M, _LANE)))
    # tn: prefer full N so every input row DMA is one contiguous slab.
    if N * tm * itemsize <= target:
        tn = N
    else:
        tn = max(_LANE, _round_down(target // (tm * itemsize), _LANE))
        tn = min(tn, max(_LANE, _round_down(N, _LANE)))
    bt = max(1, min(B, target // max(1, tm * tn * itemsize)))

    if (pl.cdiv(B, bt) * pl.cdiv(M, tm) * pl.cdiv(N, tn) == 1
            and B * M * N * itemsize > 512 * 1024):
        if bt >= 2:
            bt = pl.cdiv(bt, 2)
        elif N >= 2 * _LANE:
            tn = max(_LANE, _round_down(tn // 2, _LANE))
        elif M >= 2 * _LANE:
            tm = max(_LANE, _round_down(tm // 2, _LANE))
    return bt, tm, tn


# --------------------------------------------------------------------------
# Kernel bodies
# --------------------------------------------------------------------------
def _swap_minor2_kernel(x_ref, o_ref):
    # (bt, tm, tn) -> (bt, tn, tm): batched XLU transpose of the minor dims.
    o_ref[...] = jnp.swapaxes(x_ref[...], 1, 2)


def _swap_minor2_flat_kernel(x_ref, o_ref):
    # (bt, M, tn) -> (bt, tn*M): transpose then flatten so stores are wide
    # unmasked vsts even when M is small (e.g. C=4).
    # TODO(synk): if a bundle dump shows this lowering as a lane-packing
    # relayout, switch to pltpu.einshape("bmn->b(nm)", ...) once grouped-output
    # equations are confirmed supported by the installed jax version.
    bt, m, tn = x_ref.shape
    o_ref[...] = jnp.swapaxes(x_ref[...], 1, 2).reshape(bt, tn * m)


def _permute_kernel(x_ref, o_ref, *, perm):
    o_ref[...] = jnp.transpose(x_ref[...], perm)


# --------------------------------------------------------------------------
# pallas_call builders
# --------------------------------------------------------------------------
def _batched_transpose_flat(xv, B, M, N):
    """(B, M, N) -> (B, N*M): lane-dense flattened output, batch + N tiled."""
    itemsize = xv.dtype.itemsize
    bt, tn = _flat_tiles(B, M, N, itemsize)
    grid = (pl.cdiv(B, bt), pl.cdiv(N, tn))
    return pl.pallas_call(
        _swap_minor2_flat_kernel,
        out_shape=jax.ShapeDtypeStruct((B, N * M), xv.dtype),
        grid=grid,
        in_specs=[pl.BlockSpec((bt, M, tn), lambda b, jn: (b, 0, jn))],
        out_specs=pl.BlockSpec((bt, tn * M), lambda b, jn: (b, jn)),
        compiler_params=_compiler_params(("parallel", "parallel")),
        cost_estimate=_cost(xv),
    )(xv)


def _batched_transpose(xv, B, M, N):
    """(B, M, N) -> (B, N, M): batch / M / N tiled; innermost grid axis walks
    the contiguous N dimension of the input."""
    itemsize = xv.dtype.itemsize
    bt, tm, tn = _tiles_3d(B, M, N, itemsize)
    grid = (pl.cdiv(B, bt), pl.cdiv(M, tm), pl.cdiv(N, tn))
    return pl.pallas_call(
        _swap_minor2_kernel,
        out_shape=jax.ShapeDtypeStruct((B, N, M), xv.dtype),
        grid=grid,
        in_specs=[pl.BlockSpec((bt, tm, tn), lambda b, jm, jn: (b, jm, jn))],
        out_specs=pl.BlockSpec((bt, tn, tm), lambda b, jm, jn: (b, jn, jm)),
        compiler_params=_compiler_params(("parallel", "parallel", "parallel")),
        cost_estimate=_cost(xv),
    )(xv)


def _general_permute(xc, cshape, cperm):
    """Arbitrary permutation of the coalesced (>=3-D) array, with bounded blocks."""
    nd = len(cshape)
    coshape = tuple(cshape[a] for a in cperm)
    itemsize = xc.dtype.itemsize
    target = _BLOCK_BYTES

    in_block = list(cshape)
    grid_axes = []   # (input_axis, tile) in grid order

    # Level 1: grid over the largest axis outside the last-two (layout) dims of
    # BOTH input and output — a block of 1 there is always legal.
    cand = [a for a in range(nd)
            if cshape[a] > 1 and a <= nd - 3 and cperm.index(a) <= nd - 3]
    if cand:
        ax = max(cand, key=lambda a: cshape[a])
        in_block[ax] = 1
        grid_axes.append((ax, 1))

    # Level 2: if the block is still above the byte target, also tile the
    # input's lane (last) dim to a 128-multiple (legal wherever it lands in
    # the output: 128-multiples satisfy both the lane and sublane constraints).
    lane_ax = nd - 1
    if (math.prod(in_block) * itemsize > target and cshape[lane_ax] > _LANE):
        other_elems = math.prod(in_block) // in_block[lane_ax]
        tl = max(_LANE, _round_down(target // max(1, other_elems * itemsize), _LANE))
        tl = min(tl, _round_down(cshape[lane_ax], _LANE))
        in_block[lane_ax] = tl
        grid_axes.append((lane_ax, tl))
    # TODO(synk): a permutation whose block still exceeds VMEM after these two
    # levels (all huge dims trapped in the last-two of both sides) would need a
    # scratch-based two-level transpose; not needed at these sizes.

    out_block = tuple(in_block[a] for a in cperm)
    if grid_axes:
        grid = tuple(pl.cdiv(cshape[ax], t) for ax, t in grid_axes)
        dim_sem = ("parallel",) * len(grid)
    else:
        grid = (1,)
        dim_sem = ("arbitrary",)

    in_axes = [ax for ax, _ in grid_axes]
    out_axes = [cperm.index(ax) for ax, _ in grid_axes]

    def in_map(*gi):
        m = [0] * nd
        for g, ax in enumerate(in_axes):
            m[ax] = gi[g]
        return tuple(m)

    def out_map(*gi):
        m = [0] * nd
        for g, ax in enumerate(out_axes):
            m[ax] = gi[g]
        return tuple(m)

    return pl.pallas_call(
        functools.partial(_permute_kernel, perm=cperm),
        out_shape=jax.ShapeDtypeStruct(coshape, xc.dtype),
        grid=grid,
        in_specs=[pl.BlockSpec(tuple(in_block), in_map)],
        out_specs=pl.BlockSpec(out_block, out_map),
        compiler_params=_compiler_params(dim_sem),
        cost_estimate=_cost(xc),
    )(xc)


# --------------------------------------------------------------------------
# Public wrapper
# --------------------------------------------------------------------------
def shuffle(x, permutation, contiguous=True):
    """Pallas equivalent of Shuffle(permutation, contiguous).forward(x).

    `contiguous=False` returns a lazy view in PyTorch; JAX has no
    non-contiguous views, so both settings return the materialized permuted
    array (same values, same shape).
    """
    del contiguous
    permutation = tuple(int(p) for p in permutation)
    nd = x.ndim
    assert sorted(permutation) == list(range(nd)), "invalid permutation"
    out_shape = tuple(x.shape[p] for p in permutation)

    cshape, cperm = _coalesce(x.shape, permutation)
    if len(cshape) <= 1 or cperm == tuple(range(len(cperm))):
        # Permutation only relabels / moves size-1 axes: free reshape.
        return jnp.reshape(x, out_shape)

    # Leading coalesced axes left in place act as a batch dimension.
    k = 0
    while cperm[k] == k:
        k += 1

    itemsize = x.dtype.itemsize
    if len(cperm) - k == 2:
        # Whole permutation is "swap two contiguous groups" (e.g. NCHW->NHWC):
        # a batched 2-D transpose (B, M, N) -> (B, N, M).
        B = math.prod(cshape[:k]) if k else 1
        M, N = cshape[k], cshape[k + 1]
        xv = x.reshape(B, M, N)
        if M % _LANE != 0 and M * itemsize <= 2048:
            # Small minor dim (e.g. C=4): lane-dense flattened output.
            y = _batched_transpose_flat(xv, B, M, N)
        else:
            y = _batched_transpose(xv, B, M, N)
        return y.reshape(out_shape)

    # General permutation (rare): tiled permute of the coalesced array.
    y = _general_permute(x.reshape(cshape), cshape, cperm)
    return y.reshape(out_shape)


if __name__ == "__main__":
    key = jax.random.PRNGKey(0)

    # Small NCHW input, matching typical use of Shuffle((0, 2, 3, 1)).
    B, C, H, W = 2, 4, 16, 16
    x = jax.random.normal(key, (B, C, H, W), dtype=jnp.float32)
    permutation = (0, 2, 3, 1)                       # NCHW -> NHWC
    y = jax.block_until_ready(shuffle(x, permutation, contiguous=True))
    y_ref = jnp.transpose(x, permutation)
    assert y.shape == (B, H, W, C), y.shape
    assert y.dtype == x.dtype
    assert jnp.array_equal(y, y_ref), "mismatch vs reference transpose (NCHW->NHWC)"

    # Wide-channel case exercising the tiled batched-transpose path.
    x2 = jax.random.normal(jax.random.PRNGKey(1), (2, 128, 8, 8), dtype=jnp.float32)
    y2 = jax.block_until_ready(shuffle(x2, (0, 2, 3, 1)))
    assert jnp.array_equal(y2, jnp.transpose(x2, (0, 2, 3, 1)))

    # A permutation that moves the leading axis (general tiled-permute path).
    x3 = jax.random.normal(jax.random.PRNGKey(2), (4, 8, 128), dtype=jnp.float32)
    y3 = jax.block_until_ready(shuffle(x3, (1, 0, 2)))
    assert jnp.array_equal(y3, jnp.transpose(x3, (1, 0, 2)))

    print("KERNEL_OK")
</pallas_src>

<mosaic_0001>
module attributes {stable_mosaic.version = 11 : i64} {
  func.func @_swap_minor2_flat_kernel(%arg0: i32, %arg1: i32, %arg2: memref<2x4x256xf32, #tpu.memory_space<vmem>>, %arg3: memref<2x1024xf32, #tpu.memory_space<vmem>>) attributes {dimension_semantics = [#tpu.dimension_semantics<parallel>, #tpu.dimension_semantics<parallel>], iteration_bounds = array<i64: 1, 1>, scalar_prefetch = 0 : i64, scratch_operands = 0 : i64, tpu.core_type = #tpu.core_type<tc>, window_params = [{transform_indices = @transform_0, window_bounds = array<i64: 2, 4, 256>}, {transform_indices = @transform_1, window_bounds = array<i64: 2, 1024>}]} {
    %c0 = arith.constant 0 : index
    %c0_0 = arith.constant 0 : index
    %c0_1 = arith.constant 0 : index
    %0 = vector.load %arg2[%c0, %c0_0, %c0_1] : memref<2x4x256xf32, #tpu.memory_space<vmem>>, vector<2x4x256xf32>
    %1 = tpu.transpose %0, [0, 2, 1] : vector<2x4x256xf32> -> vector<2x256x4xf32>
    %2 = vector.shape_cast %1 : vector<2x256x4xf32> to vector<2x1024xf32>
    %c0_2 = arith.constant 0 : index
    %c0_3 = arith.constant 0 : index
    %3 = vector.load %arg3[%c0_2, %c0_3] : memref<2x1024xf32, #tpu.memory_space<vmem>>, vector<2x1024xf32>
    tpu.vector_store %arg3[%c0_2, %c0_3], %2 {strides = array<i32>} : memref<2x1024xf32, #tpu.memory_space<vmem>>, vector<2x1024xf32>,
    return
  }
  func.func @transform_0(%arg0: i32, %arg1: i32) -> (i32, i32, i32) {
    %c0_i32 = arith.constant 0 : i32
    %c0_i32_0 = arith.constant 0 : i32
    return %arg0, %c0_i32, %arg1 : i32, i32, i32
  }
  func.func @transform_1(%arg0: i32, %arg1: i32) -> (i32, i32) {
    %c0_i32 = arith.constant 0 : i32
    return %arg0, %arg1 : i32, i32
  }
}

</mosaic_0001>

<llo_original>
// kernel: tpu_custom_call.1
$region0: #{tpu_custom_call.1}
  #allocation0 [shape = 'u32[]', space=smem, size = 0x4, offset = 0x4, fixed_abs, tag = 'smem constant byte address 0x4 - core index']
  #allocation1 [shape = 'u32[72,128]{1,0:T(1,128)}', space=vmem, size = 0x9000, scoped, tag = 'internal scratch']
  %s0 = inlined_call_operand.hbm [shape: f32[2,4,256], index: 0, kind: input, shape index: {}]
  %s1 = inlined_call_operand.hbm [shape: f32[2,1024], index: 1, kind: output, shape index: {}]
  %s2 = sld [smem:[#allocation0]]
  $region18: #{tpu_custom_call.1} parent=0
    _
  %s4 = ssub.s32 1, %s2
  %s5 = scalar_select 0, %s4, %s2
  $region1: #{tpu_custom_call.1} parent=0
    #allocation2 [shape = 'u8[8192]{0}', space=vmem, size = 0x2000, scoped, tag = 'input window, operand 0, single buffered']
    #allocation3 [shape = 's32[1]{0}', space=sflag, size = 0x4, scoped, tag = 'scoped memory for tpu_custom_call.1']
    #allocation4 [shape = 's32[1]{0}', space=sflag, size = 0x4, scoped, tag = 'scoped memory for tpu_custom_call.1']
    #allocation5 [shape = 'u8[8192]{0}', space=vmem, size = 0x2000, scoped, tag = 'output window, operand 0, single buffered']
    %6 = vsyncpa [#allocation3], 0
    %7 = vsyncpa [#allocation4], 0
    // Predicated region
    $region2: #{tpu_custom_call.1} parent=1 // pred_check
      _
    $region3: #{tpu_custom_call.1} parent=1 // pred_check_branch
      %9 = sbr.rel (0) target = $region5
    $region4: #{tpu_custom_call.1} parent=1 // pred_region
      %11 = vsyncadd [#allocation3], 0
      %s12 = sshll.u32 %s0, 4
      %s13 = int_to_ptr.hbm [resolvable:$true] %s12
      %s14 = sshll.u32 [#allocation2], 4
      %s15 = int_to_ptr.vmem [resolvable:$true] %s14
      %20 = dma.hbm_to_vmem [thread:$0]  %s13, 256, %s15, [#allocation3], 128, 128, 8
    $region5: #{tpu_custom_call.1} parent=1 // pred_fallthru
      _
    // Predicated region
    $region6: #{tpu_custom_call.1} parent=1 // pred_check
      _
    $region7: #{tpu_custom_call.1} parent=1 // pred_check_branch
      %22 = sbr.rel (0) target = $region9
    $region8: #{tpu_custom_call.1} parent=1 // pred_region
      %24 = dma.done [#allocation3], 256
    $region9: #{tpu_custom_call.1} parent=1 // pred_fallthru
      _
    %v25 = vld [vmem:[#allocation2] sm:$0xff]
    %v26 = vld [vmem:[#allocation2 + $0x8] sm:$0xff]
    %29 = vst [vmem:[#allocation1] ss:$2 sm:$0xff] %v25
    %v30 = vld.sshfl [vmem:[#allocation1] sm:$0xff pattern:$0x75316420]
    %v31 = vld.sshfl [vmem:[#allocation1 + $0x8] sm:$0xff pattern:$0x75316420]
    %s32 = scalar_lea.vmem [#allocation1], 16
    %33 = vst [vmem:[%s32] ss:$2 sm:$0xff] %v26
    %v34 = vld.sshfl [vmem:[#allocation1 + $0x10] sm:$0xff pattern:$0x75316420]
    %v35 = vld.sshfl [vmem:[#allocation1 + $0x18] sm:$0xff pattern:$0x75316420]
    %40 = vxpose.xlu0.b32.start [1/16] %v30, 128
    %41 = vxpose.xlu0.b32.cont [2/16] 0.0, 128
    %42 = vxpose.xlu0.b32.cont [3/16] 0.0, 128
    %43 = vxpose.xlu0.b32.cont [4/16] 0.0, 128
    %44 = vxpose.xlu0.b32.cont [5/16] 0.0, 128
    %45 = vxpose.xlu0.b32.cont [6/16] 0.0, 128
    %46 = vxpose.xlu0.b32.cont [7/16] 0.0, 128
    %47 = vxpose.xlu0.b32.cont [8/16] 0.0, 128
    %48 = vxpose.xlu0.b32.cont [9/16] 0.0, 128
    %49 = vxpose.xlu0.b32.cont [10/16] 0.0, 128
    %50 = vxpose.xlu0.b32.cont [11/16] 0.0, 128
    %51 = vxpose.xlu0.b32.cont [12/16] 0.0, 128
    %52 = vxpose.xlu0.b32.cont [13/16] 0.0, 128
    %53 = vxpose.xlu0.b32.cont [14/16] 0.0, 128
    %54 = vxpose.xlu0.b32.cont [15/16] 0.0, 128
    %55 = vxpose.xlu0.b32.end [16/16] 0.0, 128
    %v56 = vpop.trf.xlu0
    %v57 = vpop.trf.xlu0
    %v58 = vpop.trf.xlu0
    %v59 = vpop.trf.xlu0
    %v60 = vpop.trf.xlu0
    %v61 = vpop.trf.xlu0
    %v62 = vpop.trf.xlu0
    %v63 = vpop.trf.xlu0
    %v64 = vpop.trf.xlu0
    %v65 = vpop.trf.xlu0
    %v66 = vpop.trf.xlu0
    %v67 = vpop.trf.xlu0
    %v68 = vpop.trf.xlu0
    %v69 = vpop.trf.xlu0
    %v70 = vpop.trf.xlu0
    %v71 = vpop.trf.xlu0
    %72 = vxpose.xlu0.b32.start [1/16] %v31, 128
    %73 = vxpose.xlu0.b32.cont [2/16] 0.0, 128
    %74 = vxpose.xlu0.b32.cont [3/16] 0.0, 128
    %75 = vxpose.xlu0.b32.cont [4/16] 0.0, 128
    %76 = vxpose.xlu0.b32.cont [5/16] 0.0, 128
    %77 = vxpose.xlu0.b32.cont [6/16] 0.0, 128
    %78 = vxpose.xlu0.b32.cont [7/16] 0.0, 128
    %79 = vxpose.xlu0.b32.cont [8/16] 0.0, 128
    %80 = vxpose.xlu0.b32.cont [9/16] 0.0, 128
    %81 = vxpose.xlu0.b32.cont [10/16] 0.0, 128
    %82 = vxpose.xlu0.b32.cont [11/16] 0.0, 128
    %83 = vxpose.xlu0.b32.cont [12/16] 0.0, 128
    %84 = vxpose.xlu0.b32.cont [13/16] 0.0, 128
    %85 = vxpose.xlu0.b32.cont [14/16] 0.0, 128
    %86 = vxpose.xlu0.b32.cont [15/16] 0.0, 128
    %87 = vxpose.xlu0.b32.end [16/16] 0.0, 128
    %v88 = vpop.trf.xlu0
    %v89 = vpop.trf.xlu0
    %v90 = vpop.trf.xlu0
    %v91 = vpop.trf.xlu0
    %v92 = vpop.trf.xlu0
    %v93 = vpop.trf.xlu0
    %v94 = vpop.trf.xlu0
    %v95 = vpop.trf.xlu0
    %v96 = vpop.trf.xlu0
    %v97 = vpop.trf.xlu0
    %v98 = vpop.trf.xlu0
    %v99 = vpop.trf.xlu0
    %v100 = vpop.trf.xlu0
    %v101 = vpop.trf.xlu0
    %v102 = vpop.trf.xlu0
    %v103 = vpop.trf.xlu0
    %104 = vxpose.xlu0.b32.start [1/16] %v34, 128
    %105 = vxpose.xlu0.b32.cont [2/16] 0.0, 128
    %106 = vxpose.xlu0.b32.cont [3/16] 0.0, 128
    %107 = vxpose.xlu0.b32.cont [4/16] 0.0, 128
    %108 = vxpose.xlu0.b32.cont [5/16] 0.0, 128
    %109 = vxpose.xlu0.b32.cont [6/16] 0.0, 128
    %110 = vxpose.xlu0.b32.cont [7/16] 0.0, 128
    %111 = vxpose.xlu0.b32.cont [8/16] 0.0, 128
    %112 = vxpose.xlu0.b32.cont [9/16] 0.0, 128
    %113 = vxpose.xlu0.b32.cont [10/16] 0.0, 128
    %114 = vxpose.xlu0.b32.cont [11/16] 0.0, 128
    %115 = vxpose.xlu0.b32.cont [12/16] 0.0, 128
    %116 = vxpose.xlu0.b32.cont [13/16] 0.0, 128
    %117 = vxpose.xlu0.b32.cont [14/16] 0.0, 128
    %118 = vxpose.xlu0.b32.cont [15/16] 0.0, 128
    %119 = vxpose.xlu0.b32.end [16/16] 0.0, 128
    %v120 = vpop.trf.xlu0
    %v121 = vpop.trf.xlu0
    %v122 = vpop.trf.xlu0
    %v123 = vpop.trf.xlu0
    %v124 = vpop.trf.xlu0
    %v125 = vpop.trf.xlu0
    %v126 = vpop.trf.xlu0
    %v127 = vpop.trf.xlu0
    %v128 = vpop.trf.xlu0
    %v129 = vpop.trf.xlu0
    %v130 = vpop.trf.xlu0
    %v131 = vpop.trf.xlu0
    %v132 = vpop.trf.xlu0
    %v133 = vpop.trf.xlu0
    %v134 = vpop.trf.xlu0
    %v135 = vpop.trf.xlu0
    %136 = vxpose.xlu0.b32.start [1/16] %v35, 128
    %137 = vxpose.xlu0.b32.cont [2/16] 0.0, 128
    %138 = vxpose.xlu0.b32.cont [3/16] 0.0, 128
    %139 = vxpose.xlu0.b32.cont [4/16] 0.0, 128
    %140 = vxpose.xlu0.b32.cont [5/16] 0.0, 128
    %141 = vxpose.xlu0.b32.cont [6/16] 0.0, 128
    %142 = vxpose.xlu0.b32.cont [7/16] 0.0, 128
    %143 = vxpose.xlu0.b32.cont [8/16] 0.0, 128
    %144 = vxpose.xlu0.b32.cont [9/16] 0.0, 128
    %145 = vxpose.xlu0.b32.cont [10/16] 0.0, 128
    %146 = vxpose.xlu0.b32.cont [11/16] 0.0, 128
    %147 = vxpose.xlu0.b32.cont [12/16] 0.0, 128
    %148 = vxpose.xlu0.b32.cont [13/16] 0.0, 128
    %149 = vxpose.xlu0.b32.cont [14/16] 0.0, 128
    %150 = vxpose.xlu0.b32.cont [15/16] 0.0, 128
    %151 = vxpose.xlu0.b32.end [16/16] 0.0, 128
    %v152 = vpop.trf.xlu0
    %v153 = vpop.trf.xlu0
    %v154 = vpop.trf.xlu0
    %v155 = vpop.trf.xlu0
    %v156 = vpop.trf.xlu0
    %v157 = vpop.trf.xlu0
    %v158 = vpop.trf.xlu0
    %v159 = vpop.trf.xlu0
    %v160 = vpop.trf.xlu0
    %v161 = vpop.trf.xlu0
    %v162 = vpop.trf.xlu0
    %v163 = vpop.trf.xlu0
    %v164 = vpop.trf.xlu0
    %v165 = vpop.trf.xlu0
    %v166 = vpop.trf.xlu0
    %v167 = vpop.trf.xlu0
    %v168 = vrot.slane %v56, 4
    %vm169 = vcmask 1047556
    %v170 = vsel %vm169, 0.0, %v168
    %v172 = vunpack.c.l.s4 1983009808
    %v173 = vunpack.c.0.s8 %v172
    %v174 = vperm.slane %v56, %v173
    %v176 = vunpack.c.l.s4 1983009808
    %v177 = vunpack.c.0.s8 %v176
    %v178 = vperm.slane %v170, %v177
    %v179 = vrot.slane %v120, 4
    %v180 = vsel %vm169, 0.0, %v179
    %v182 = vunpack.c.l.s4 1983009808
    %v183 = vunpack.c.0.s8 %v182
    %v184 = vperm.slane %v120, %v183
    %v186 = vunpack.c.l.s4 1983009808
    %v187 = vunpack.c.0.s8 %v186
    %v188 = vperm.slane %v180, %v187
    %v189 = vrot.slane %v184, 4
    %v190 = vsel %vm169, %v189, %v174
    %v191 = vrot.slane %v174, 4
    %v192 = vsel %vm169, %v184, %v191
    %v194 = vunpack.c.l.s4 1934713408
    %v195 = vunpack.c.0.s8 %v194
    %v196 = vperm.slane %v190, %v195
    %v198 = vunpack.c.l.s4 1934713408
    %v199 = vunpack.c.0.s8 %v198
    %v200 = vperm.slane %v192, %v199
    %v201 = vrot.slane %v188, 4
    %v202 = vsel %vm169, %v201, %v178
    %v203 = vrot.slane %v178, 4
    %v204 = vsel %vm169, %v188, %v203
    %v206 = vunpack.c.l.s4 1934713408
    %v207 = vunpack.c.0.s8 %v206
    %v208 = vperm.slane %v202, %v207
    %v210 = vunpack.c.l.s4 1934713408
    %v211 = vunpack.c.0.s8 %v210
    %v212 = vperm.slane %v204, %v211
    %v213 = vrot.slane %v196, 4
    %v214 = vsel %vm169, 0.0, %v213
    %v215 = vrot.slane %v200, 4
    %v216 = vsel %vm169, 0.0, %v215
    %v217 = vrot.slane %v208, 4
    %v218 = vsel %vm169, 0.0, %v217
    %v219 = vrot.slane %v212, 4
    %v220 = vsel %vm169, 0.0, %v219
    %v221 = vrot.slane %v57, 4
    %v222 = vsel %vm169, 0.0, %v221
    %v224 = vunpack.c.l.s4 1983009808
    %v225 = vunpack.c.0.s8 %v224
    %v226 = vperm.slane %v57, %v225
    %v228 = vunpack.c.l.s4 1983009808
    %v229 = vunpack.c.0.s8 %v228
    %v230 = vperm.slane %v222, %v229
    %v231 = vrot.slane %v121, 4
    %v232 = vsel %vm169, 0.0, %v231
    %v234 = vunpack.c.l.s4 1983009808
    %v235 = vunpack.c.0.s8 %v234
    %v236 = vperm.slane %v121, %v235
    %v238 = vunpack.c.l.s4 1983009808
    %v239 = vunpack.c.0.s8 %v238
    %v240 = vperm.slane %v232, %v239
    %v241 = vrot.slane %v236, 4
    %v242 = vsel %vm169, %v241, %v226
    %v243 = vrot.slane %v226, 4
    %v244 = vsel %vm169, %v236, %v243
    %v246 = vunpack.c.l.s4 1934713408
    %v247 = vunpack.c.0.s8 %v246
    %v248 = vperm.slane %v242, %v247
    %v250 = vunpack.c.l.s4 1934713408
    %v251 = vunpack.c.0.s8 %v250
    %v252 = vperm.slane %v244, %v251
    %v253 = vrot.slane %v240, 4
    %v254 = vsel %vm169, %v253, %v230
    %v255 = vrot.slane %v230, 4
    %v256 = vsel %vm169, %v240, %v255
    %v258 = vunpack.c.l.s4 1934713408
    %v259 = vunpack.c.0.s8 %v258
    %v260 = vperm.slane %v254, %v259
    %v262 = vunpack.c.l.s4 1934713408
    %v263 = vunpack.c.0.s8 %v262
    %v264 = vperm.slane %v256, %v263
    %v265 = vrot.slane %v248, 4
    %v266 = vsel %vm169, 0.0, %v265
    %v267 = vrot.slane %v252, 4
    %v268 = vsel %vm169, 0.0, %v267
    %v269 = vrot.slane %v260, 4
    %v270 = vsel %vm169, 0.0, %v269
    %v271 = vrot.slane %v264, 4
    %v272 = vsel %vm169, 0.0, %v271
    %v273 = vrot.slane %v58, 4
    %v274 = vsel %vm169, 0.0, %v273
    %v276 = vunpack.c.l.s4 1983009808
    %v277 = vunpack.c.0.s8 %v276
    %v278 = vperm.slane %v58, %v277
    %v280 = vunpack.c.l.s4 1983009808
    %v281 = vunpack.c.0.s8 %v280
    %v282 = vperm.slane %v274, %v281
    %v283 = vrot.slane %v122, 4
    %v284 = vsel %vm169, 0.0, %v283
    %v286 = vunpack.c.l.s4 1983009808
    %v287 = vunpack.c.0.s8 %v286
    %v288 = vperm.slane %v122, %v287
    %v290 = vunpack.c.l.s4 1983009808
    %v291 = vunpack.c.0.s8 %v290
    %v292 = vperm.slane %v284, %v291
    %v293 = vrot.slane %v288, 4
    %v294 = vsel %vm169, %v293, %v278
    %v295 = vrot.slane %v278, 4
    %v296 = vsel %vm169, %v288, %v295
    %v298 = vunpack.c.l.s4 1934713408
    %v299 = vunpack.c.0.s8 %v298
    %v300 = vperm.slane %v294, %v299
    %v302 = vunpack.c.l.s4 1934713408
    %v303 = vunpack.c.0.s8 %v302
    %v304 = vperm.slane %v296, %v303
    %v305 = vrot.slane %v292, 4
    %v306 = vsel %vm169, %v305, %v282
    %v307 = vrot.slane %v282, 4
    %v308 = vsel %vm169, %v292, %v307
    %v310 = vunpack.c.l.s4 1934713408
    %v311 = vunpack.c.0.s8 %v310
    %v312 = vperm.slane %v306, %v311
    %v314 = vunpack.c.l.s4 1934713408
    %v315 = vunpack.c.0.s8 %v314
    %v316 = vperm.slane %v308, %v315
    %v317 = vrot.slane %v300, 4
    %v318 = vsel %vm169, 0.0, %v317
    %v319 = vrot.slane %v304, 4
    %v320 = vsel %vm169, 0.0, %v319
    %v321 = vrot.slane %v312, 4
    %v322 = vsel %vm169, 0.0, %v321
    %v323 = vrot.slane %v316, 4
    %v324 = vsel %vm169, 0.0, %v323
    %v325 = vrot.slane %v59, 4
    %v326 = vsel %vm169, 0.0, %v325
    %v328 = vunpack.c.l.s4 1983009808
    %v329 = vunpack.c.0.s8 %v328
    %v330 = vperm.slane %v59, %v329
    %v332 = vunpack.c.l.s4 1983009808
    %v333 = vunpack.c.0.s8 %v332
    %v334 = vperm.slane %v326, %v333
    %v335 = vrot.slane %v123, 4
    %v336 = vsel %vm169, 0.0, %v335
    %v338 = vunpack.c.l.s4 1983009808
    %v339 = vunpack.c.0.s8 %v338
    %v340 = vperm.slane %v123, %v339
    %v342 = vunpack.c.l.s4 1983009808
    %v343 = vunpack.c.0.s8 %v342
    %v344 = vperm.slane %v336, %v343
    %v345 = vrot.slane %v340, 4
    %v346 = vsel %vm169, %v345, %v330
    %v347 = vrot.slane %v330, 4
    %v348 = vsel %vm169, %v340, %v347
    %v350 = vunpack.c.l.s4 1934713408
    %v351 = vunpack.c.0.s8 %v350
    %v352 = vperm.slane %v346, %v351
    %v354 = vunpack.c.l.s4 1934713408
    %v355 = vunpack.c.0.s8 %v354
    %v356 = vperm.slane %v348, %v355
    %v357 = vrot.slane %v344, 4
    %v358 = vsel %vm169, %v357, %v334
    %v359 = vrot.slane %v334, 4
    %v360 = vsel %vm169, %v344, %v359
    %v362 = vunpack.c.l.s4 1934713408
    %v363 = vunpack.c.0.s8 %v362
    %v364 = vperm.slane %v358, %v363
    %v366 = vunpack.c.l.s4 1934713408
    %v367 = vunpack.c.0.s8 %v366
    %v368 = vperm.slane %v360, %v367
    %v369 = vrot.slane %v352, 4
    %v370 = vsel %vm169, 0.0, %v369
    %v371 = vrot.slane %v356, 4
    %v372 = vsel %vm169, 0.0, %v371
    %v373 = vrot.slane %v364, 4
    %v374 = vsel %vm169, 0.0, %v373
    %v375 = vrot.slane %v368, 4
    %v376 = vsel %vm169, 0.0, %v375
    %v377 = vrot.slane %v60, 4
    %v378 = vsel %vm169, 0.0, %v377
    %v380 = vunpack.c.l.s4 1983009808
    %v381 = vunpack.c.0.s8 %v380
    %v382 = vperm.slane %v60, %v381
    %v384 = vunpack.c.l.s4 1983009808
    %v385 = vunpack.c.0.s8 %v384
    %v386 = vperm.slane %v378, %v385
    %v387 = vrot.slane %v124, 4
    %v388 = vsel %vm169, 0.0, %v387
    %v390 = vunpack.c.l.s4 1983009808
    %v391 = vunpack.c.0.s8 %v390
    %v392 = vperm.slane %v124, %v391
    %v394 = vunpack.c.l.s4 1983009808
    %v395 = vunpack.c.0.s8 %v394
    %v396 = vperm.slane %v388, %v395
    %v397 = vrot.slane %v392, 4
    %v398 = vsel %vm169, %v397, %v382
    %v399 = vrot.slane %v382, 4
    %v400 = vsel %vm169, %v392, %v399
    %v402 = vunpack.c.l.s4 1934713408
    %v403 = vunpack.c.0.s8 %v402
    %v404 = vperm.slane %v398, %v403
    %v406 = vunpack.c.l.s4 1934713408
    %v407 = vunpack.c.0.s8 %v406
    %v408 = vperm.slane %v400, %v407
    %v409 = vrot.slane %v396, 4
    %v410 = vsel %vm169, %v409, %v386
    %v411 = vrot.slane %v386, 4
    %v412 = vsel %vm169, %v396, %v411
    %v414 = vunpack.c.l.s4 1934713408
    %v415 = vunpack.c.0.s8 %v414
    %v416 = vperm.slane %v410, %v415
    %v418 = vunpack.c.l.s4 1934713408
    %v419 = vunpack.c.0.s8 %v418
    %v420 = vperm.slane %v412, %v419
    %v421 = vrot.slane %v404, 4
    %v422 = vsel %vm169, 0.0, %v421
    %v423 = vrot.slane %v408, 4
    %v424 = vsel %vm169, 0.0, %v423
    %v425 = vrot.slane %v416, 4
    %v426 = vsel %vm169, 0.0, %v425
    %v427 = vrot.slane %v420, 4
    %v428 = vsel %vm169, 0.0, %v427
    %v429 = vrot.slane %v61, 4
    %v430 = vsel %vm169, 0.0, %v429
    %v432 = vunpack.c.l.s4 1983009808
    %v433 = vunpack.c.0.s8 %v432
    %v434 = vperm.slane %v61, %v433
    %v436 = vunpack.c.l.s4 1983009808
    %v437 = vunpack.c.0.s8 %v436
    %v438 = vperm.slane %v430, %v437
    %v439 = vrot.slane %v125, 4
    %v440 = vsel %vm169, 0.0, %v439
    %v442 = vunpack.c.l.s4 1983009808
    %v443 = vunpack.c.0.s8 %v442
    %v444 = vperm.slane %v125, %v443
    %v446 = vunpack.c.l.s4 1983009808
    %v447 = vunpack.c.0.s8 %v446
    %v448 = vperm.slane %v440, %v447
    %v449 = vrot.slane %v444, 4
    %v450 = vsel %vm169, %v449, %v434
    %v451 = vrot.slane %v434, 4
    %v452 = vsel %vm169, %v444, %v451
    %v454 = vunpack.c.l.s4 1934713408
    %v455 = vunpack.c.0.s8 %v454
    %v456 = vperm.slane %v450, %v455
    %v458 = vunpack.c.l.s4 1934713408
    %v459 = vunpack.c.0.s8 %v458
    %v460 = vperm.slane %v452, %v459
    %v461 = vrot.slane %v448, 4
    %v462 = vsel %vm169, %v461, %v438
    %v463 = vrot.slane %v438, 4
    %v464 = vsel %vm169, %v448, %v463
    %v466 = vunpack.c.l.s4 1934713408
    %v467 = vunpack.c.0.s8 %v466
    %v468 = vperm.slane %v462, %v467
    %v470 = vunpack.c.l.s4 1934713408
    %v471 = vunpack.c.0.s8 %v470
    %v472 = vperm.slane %v464, %v471
    %v473 = vrot.slane %v456, 4
    %v474 = vsel %vm169, 0.0, %v473
    %v475 = vrot.slane %v460, 4
    %v476 = vsel %vm169, 0.0, %v475
    %v477 = vrot.slane %v468, 4
    %v478 = vsel %vm169, 0.0, %v477
    %v479 = vrot.slane %v472, 4
    %v480 = vsel %vm169, 0.0, %v479
    %v481 = vrot.slane %v62, 4
    %v482 = vsel %vm169, 0.0, %v481
    %v484 = vunpack.c.l.s4 1983009808
    %v485 = vunpack.c.0.s8 %v484
    %v486 = vperm.slane %v62, %v485
    %v488 = vunpack.c.l.s4 1983009808
    %v489 = vunpack.c.0.s8 %v488
    %v490 = vperm.slane %v482, %v489
    %v491 = vrot.slane %v126, 4
    %v492 = vsel %vm169, 0.0, %v491
    %v494 = vunpack.c.l.s4 1983009808
    %v495 = vunpack.c.0.s8 %v494
    %v496 = vperm.slane %v126, %v495
    %v498 = vunpack.c.l.s4 1983009808
    %v499 = vunpack.c.0.s8 %v498
    %v500 = vperm.slane %v492, %v499
    %v501 = vrot.slane %v496, 4
    %v502 = vsel %vm169, %v501, %v486
    %v503 = vrot.slane %v486, 4
    %v504 = vsel %vm169, %v496, %v503
    %v506 = vunpack.c.l.s4 1934713408
    %v507 = vunpack.c.0.s8 %v506
    %v508 = vperm.slane %v502, %v507
    %v510 = vunpack.c.l.s4 1934713408
    %v511 = vunpack.c.0.s8 %v510
    %v512 = vperm.slane %v504, %v511
    %v513 = vrot.slane %v500, 4
    %v514 = vsel %vm169, %v513, %v490
    %v515 = vrot.slane %v490, 4
    %v516 = vsel %vm169, %v500, %v515
    %v518 = vunpack.c.l.s4 1934713408
    %v519 = vunpack.c.0.s8 %v518
    %v520 = vperm.slane %v514, %v519
    %v522 = vunpack.c.l.s4 1934713408
    %v523 = vunpack.c.0.s8 %v522
    %v524 = vperm.slane %v516, %v523
    %v525 = vrot.slane %v508, 4
    %v526 = vsel %vm169, 0.0, %v525
    %v527 = vrot.slane %v512, 4
    %v528 = vsel %vm169, 0.0, %v527
    %v529 = vrot.slane %v520, 4
    %v530 = vsel %vm169, 0.0, %v529
    %v531 = vrot.slane %v524, 4
    %v532 = vsel %vm169, 0.0, %v531
    %v533 = vrot.slane %v63, 4
    %v534 = vsel %vm169, 0.0, %v533
    %v536 = vunpack.c.l.s4 1983009808
    %v537 = vunpack.c.0.s8 %v536
    %v538 = vperm.slane %v63, %v537
    %v540 = vunpack.c.l.s4 1983009808
    %v541 = vunpack.c.0.s8 %v540
    %v542 = vperm.slane %v534, %v541
    %v543 = vrot.slane %v127, 4
    %v544 = vsel %vm169, 0.0, %v543
    %v546 = vunpack.c.l.s4 1983009808
    %v547 = vunpack.c.0.s8 %v546
    %v548 = vperm.slane %v127, %v547
    %v550 = vunpack.c.l.s4 1983009808
    %v551 = vunpack.c.0.s8 %v550
    %v552 = vperm.slane %v544, %v551
    %v553 = vrot.slane %v548, 4
    %v554 = vsel %vm169, %v553, %v538
    %v555 = vrot.slane %v538, 4
    %v556 = vsel %vm169, %v548, %v555
    %v558 = vunpack.c.l.s4 1934713408
    %v559 = vunpack.c.0.s8 %v558
    %v560 = vperm.slane %v554, %v559
    %v562 = vunpack.c.l.s4 1934713408
    %v563 = vunpack.c.0.s8 %v562
    %v564 = vperm.slane %v556, %v563
    %v565 = vrot.slane %v552, 4
    %v566 = vsel %vm169, %v565, %v542
    %v567 = vrot.slane %v542, 4
    %v568 = vsel %vm169, %v552, %v567
    %v570 = vunpack.c.l.s4 1934713408
    %v571 = vunpack.c.0.s8 %v570
    %v572 = vperm.slane %v566, %v571
    %v574 = vunpack.c.l.s4 1934713408
    %v575 = vunpack.c.0.s8 %v574
    %v576 = vperm.slane %v568, %v575
    %v577 = vrot.slane %v560, 4
    %v578 = vsel %vm169, 0.0, %v577
    %v579 = vrot.slane %v564, 4
    %v580 = vsel %vm169, 0.0, %v579
    %v581 = vrot.slane %v572, 4
    %v582 = vsel %vm169, 0.0, %v581
    %v583 = vrot.slane %v576, 4
    %v584 = vsel %vm169, 0.0, %v583
    %v585 = vrot.slane %v64, 4
    %v586 = vsel %vm169, 0.0, %v585
    %v588 = vunpack.c.l.s4 1983009808
    %v589 = vunpack.c.0.s8 %v588
    %v590 = vperm.slane %v64, %v589
    %v592 = vunpack.c.l.s4 1983009808
    %v593 = vunpack.c.0.s8 %v592
    %v594 = vperm.slane %v586, %v593
    %v595 = vrot.slane %v128, 4
    %v596 = vsel %vm169, 0.0, %v595
    %v598 = vunpack.c.l.s4 1983009808
    %v599 = vunpack.c.0.s8 %v598
    %v600 = vperm.slane %v128, %v599
    %v602 = vunpack.c.l.s4 1983009808
    %v603 = vunpack.c.0.s8 %v602
    %v604 = vperm.slane %v596, %v603
    %v605 = vrot.slane %v600, 4
    %v606 = vsel %vm169, %v605, %v590
    %v607 = vrot.slane %v590, 4
    %v608 = vsel %vm169, %v600, %v607
    %v610 = vunpack.c.l.s4 1934713408
    %v611 = vunpack.c.0.s8 %v610
    %v612 = vperm.slane %v606, %v611
    %v614 = vunpack.c.l.s4 1934713408
    %v615 = vunpack.c.0.s8 %v614
    %v616 = vperm.slane %v608, %v615
    %v617 = vrot.slane %v604, 4
    %v618 = vsel %vm169, %v617, %v594
    %v619 = vrot.slane %v594, 4
    %v620 = vsel %vm169, %v604, %v619
    %v622 = vunpack.c.l.s4 1934713408
    %v623 = vunpack.c.0.s8 %v622
    %v624 = vperm.slane %v618, %v623
    %v626 = vunpack.c.l.s4 1934713408
    %v627 = vunpack.c.0.s8 %v626
    %v628 = vperm.slane %v620, %v627
    %v629 = vrot.slane %v612, 4
    %v630 = vsel %vm169, 0.0, %v629
    %v631 = vrot.slane %v616, 4
    %v632 = vsel %vm169, 0.0, %v631
    %v633 = vrot.slane %v624, 4
    %v634 = vsel %vm169, 0.0, %v633
    %v635 = vrot.slane %v628, 4
    %v636 = vsel %vm169, 0.0, %v635
    %v637 = vrot.slane %v65, 4
    %v638 = vsel %vm169, 0.0, %v637
    %v640 = vunpack.c.l.s4 1983009808
    %v641 = vunpack.c.0.s8 %v640
    %v642 = vperm.slane %v65, %v641
    %v644 = vunpack.c.l.s4 1983009808
    %v645 = vunpack.c.0.s8 %v644
    %v646 = vperm.slane %v638, %v645
    %v647 = vrot.slane %v129, 4
    %v648 = vsel %vm169, 0.0, %v647
    %v650 = vunpack.c.l.s4 1983009808
    %v651 = vunpack.c.0.s8 %v650
    %v652 = vperm.slane %v129, %v651
    %v654 = vunpack.c.l.s4 1983009808
    %v655 = vunpack.c.0.s8 %v654
    %v656 = vperm.slane %v648, %v655
    %v657 = vrot.slane %v652, 4
    %v658 = vsel %vm169, %v657, %v642
    %v659 = vrot.slane %v642, 4
    %v660 = vsel %vm169, %v652, %v659
    %v662 = vunpack.c.l.s4 1934713408
    %v663 = vunpack.c.0.s8 %v662
    %v664 = vperm.slane %v658, %v663
    %v666 = vunpack.c.l.s4 1934713408
    %v667 = vunpack.c.0.s8 %v666
    %v668 = vperm.slane %v660, %v667
    %v669 = vrot.slane %v656, 4
    %v670 = vsel %vm169, %v669, %v646
    %v671 = vrot.slane %v646, 4
    %v672 = vsel %vm169, %v656, %v671
    %v674 = vunpack.c.l.s4 1934713408
    %v675 = vunpack.c.0.s8 %v674
    %v676 = vperm.slane %v670, %v675
    %v678 = vunpack.c.l.s4 1934713408
    %v679 = vunpack.c.0.s8 %v678
    %v680 = vperm.slane %v672, %v679
    %v681 = vrot.slane %v664, 4
    %v682 = vsel %vm169, 0.0, %v681
    %v683 = vrot.slane %v668, 4
    %v684 = vsel %vm169, 0.0, %v683
    %v685 = vrot.slane %v676, 4
    %v686 = vsel %vm169, 0.0, %v685
    %v687 = vrot.slane %v680, 4
    %v688 = vsel %vm169, 0.0, %v687
    %v689 = vrot.slane %v66, 4
    %v690 = vsel %vm169, 0.0, %v689
    %v692 = vunpack.c.l.s4 1983009808
    %v693 = vunpack.c.0.s8 %v692
    %v694 = vperm.slane %v66, %v693
    %v696 = vunpack.c.l.s4 1983009808
    %v697 = vunpack.c.0.s8 %v696
    %v698 = vperm.slane %v690, %v697
    %v699 = vrot.slane %v130, 4
    %v700 = vsel %vm169, 0.0, %v699
    %v702 = vunpack.c.l.s4 1983009808
    %v703 = vunpack.c.0.s8 %v702
    %v704 = vperm.slane %v130, %v703
    %v706 = vunpack.c.l.s4 1983009808
    %v707 = vunpack.c.0.s8 %v706
    %v708 = vperm.slane %v700, %v707
    %v709 = vrot.slane %v704, 4
    %v710 = vsel %vm169, %v709, %v694
    %v711 = vrot.slane %v694, 4
    %v712 = vsel %vm169, %v704, %v711
    %v714 = vunpack.c.l.s4 1934713408
    %v715 = vunpack.c.0.s8 %v714
    %v716 = vperm.slane %v710, %v715
    %v718 = vunpack.c.l.s4 1934713408
    %v719 = vunpack.c.0.s8 %v718
    %v720 = vperm.slane %v712, %v719
    %v721 = vrot.slane %v708, 4
    %v722 = vsel %vm169, %v721, %v698
    %v723 = vrot.slane %v698, 4
    %v724 = vsel %vm169, %v708, %v723
    %v726 = vunpack.c.l.s4 1934713408
    %v727 = vunpack.c.0.s8 %v726
    %v728 = vperm.slane %v722, %v727
    %v730 = vunpack.c.l.s4 1934713408
    %v731 = vunpack.c.0.s8 %v730
    %v732 = vperm.slane %v724, %v731
    %v733 = vrot.slane %v716, 4
    %v734 = vsel %vm169, 0.0, %v733
    %v735 = vrot.slane %v720, 4
    %v736 = vsel %vm169, 0.0, %v735
    %v737 = vrot.slane %v728, 4
    %v738 = vsel %vm169, 0.0, %v737
    %v739 = vrot.slane %v732, 4
    %v740 = vsel %vm169, 0.0, %v739
    %v741 = vrot.slane %v67, 4
    %v742 = vsel %vm169, 0.0, %v741
    %v744 = vunpack.c.l.s4 1983009808
    %v745 = vunpack.c.0.s8 %v744
    %v746 = vperm.slane %v67, %v745
    %v748 = vunpack.c.l.s4 1983009808
    %v749 = vunpack.c.0.s8 %v748
    %v750 = vperm.slane %v742, %v749
    %v751 = vrot.slane %v131, 4
    %v752 = vsel %vm169, 0.0, %v751
    %v754 = vunpack.c.l.s4 1983009808
    %v755 = vunpack.c.0.s8 %v754
    %v756 = vperm.slane %v131, %v755
    %v758 = vunpack.c.l.s4 1983009808
    %v759 = vunpack.c.0.s8 %v758
    %v760 = vperm.slane %v752, %v759
    %v761 = vrot.slane %v756, 4
    %v762 = vsel %vm169, %v761, %v746
    %v763 = vrot.slane %v746, 4
    %v764 = vsel %vm169, %v756, %v763
    %v766 = vunpack.c.l.s4 1934713408
    %v767 = vunpack.c.0.s8 %v766
    %v768 = vperm.slane %v762, %v767
    %v770 = vunpack.c.l.s4 1934713408
    %v771 = vunpack.c.0.s8 %v770
    %v772 = vperm.slane %v764, %v771
    %v773 = vrot.slane %v760, 4
    %v774 = vsel %vm169, %v773, %v750
    %v775 = vrot.slane %v750, 4
    %v776 = vsel %vm169, %v760, %v775
    %v778 = vunpack.c.l.s4 1934713408
    %v779 = vunpack.c.0.s8 %v778
    %v780 = vperm.slane %v774, %v779
    %v782 = vunpack.c.l.s4 1934713408
    %v783 = vunpack.c.0.s8 %v782
    %v784 = vperm.slane %v776, %v783
    %v785 = vrot.slane %v768, 4
    %v786 = vsel %vm169, 0.0, %v785
    %v787 = vrot.slane %v772, 4
    %v788 = vsel %vm169, 0.0, %v787
    %v789 = vrot.slane %v780, 4
    %v790 = vsel %vm169, 0.0, %v789
    %v791 = vrot.slane %v784, 4
    %v792 = vsel %vm169, 0.0, %v791
    %v793 = vrot.slane %v68, 4
    %v794 = vsel %vm169, 0.0, %v793
    %v796 = vunpack.c.l.s4 1983009808
    %v797 = vunpack.c.0.s8 %v796
    %v798 = vperm.slane %v68, %v797
    %v800 = vunpack.c.l.s4 1983009808
    %v801 = vunpack.c.0.s8 %v800
    %v802 = vperm.slane %v794, %v801
    %v803 = vrot.slane %v132, 4
    %v804 = vsel %vm169, 0.0, %v803
    %v806 = vunpack.c.l.s4 1983009808
    %v807 = vunpack.c.0.s8 %v806
    %v808 = vperm.slane %v132, %v807
    %v810 = vunpack.c.l.s4 1983009808
    %v811 = vunpack.c.0.s8 %v810
    %v812 = vperm.slane %v804, %v811
    %v813 = vrot.slane %v808, 4
    %v814 = vsel %vm169, %v813, %v798
    %v815 = vrot.slane %v798, 4
    %v816 = vsel %vm169, %v808, %v815
    %v818 = vunpack.c.l.s4 1934713408
    %v819 = vunpack.c.0.s8 %v818
    %v820 = vperm.slane %v814, %v819
    %v822 = vunpack.c.l.s4 1934713408
    %v823 = vunpack.c.0.s8 %v822
    %v824 = vperm.slane %v816, %v823
    %v825 = vrot.slane %v812, 4
    %v826 = vsel %vm169, %v825, %v802
    %v827 = vrot.slane %v802, 4
    %v828 = vsel %vm169, %v812, %v827
    %v830 = vunpack.c.l.s4 1934713408
    %v831 = vunpack.c.0.s8 %v830
    %v832 = vperm.slane %v826, %v831
    %v834 = vunpack.c.l.s4 1934713408
    %v835 = vunpack.c.0.s8 %v834
    %v836 = vperm.slane %v828, %v835
    %v837 = vrot.slane %v820, 4
    %v838 = vsel %vm169, 0.0, %v837
    %v839 = vrot.slane %v824, 4
    %v840 = vsel %vm169, 0.0, %v839
    %v841 = vrot.slane %v832, 4
    %v842 = vsel %vm169, 0.0, %v841
    %v843 = vrot.slane %v836, 4
    %v844 = vsel %vm169, 0.0, %v843
    %v845 = vrot.slane %v69, 4
    %v846 = vsel %vm169, 0.0, %v845
    %v848 = vunpack.c.l.s4 1983009808
    %v849 = vunpack.c.0.s8 %v848
    %v850 = vperm.slane %v69, %v849
    %v852 = vunpack.c.l.s4 1983009808
    %v853 = vunpack.c.0.s8 %v852
    %v854 = vperm.slane %v846, %v853
    %v855 = vrot.slane %v133, 4
    %v856 = vsel %vm169, 0.0, %v855
    %v858 = vunpack.c.l.s4 1983009808
    %v859 = vunpack.c.0.s8 %v858
    %v860 = vperm.slane %v133, %v859
    %v862 = vunpack.c.l.s4 1983009808
    %v863 = vunpack.c.0.s8 %v862
    %v864 = vperm.slane %v856, %v863
    %v865 = vrot.slane %v860, 4
    %v866 = vsel %vm169, %v865, %v850
    %v867 = vrot.slane %v850, 4
    %v868 = vsel %vm169, %v860, %v867
    %v870 = vunpack.c.l.s4 1934713408
    %v871 = vunpack.c.0.s8 %v870
    %v872 = vperm.slane %v866, %v871
    %v874 = vunpack.c.l.s4 1934713408
    %v875 = vunpack.c.0.s8 %v874
    %v876 = vperm.slane %v868, %v875
    %v877 = vrot.slane %v864, 4
    %v878 = vsel %vm169, %v877, %v854
    %v879 = vrot.slane %v854, 4
    %v880 = vsel %vm169, %v864, %v879
    %v882 = vunpack.c.l.s4 1934713408
    %v883 = vunpack.c.0.s8 %v882
    %v884 = vperm.slane %v878, %v883
    %v886 = vunpack.c.l.s4 1934713408
    %v887 = vunpack.c.0.s8 %v886
    %v888 = vperm.slane %v880, %v887
    %v889 = vrot.slane %v872, 4
    %v890 = vsel %vm169, 0.0, %v889
    %v891 = vrot.slane %v876, 4
    %v892 = vsel %vm169, 0.0, %v891
    %v893 = vrot.slane %v884, 4
    %v894 = vsel %vm169, 0.0, %v893
    %v895 = vrot.slane %v888, 4
    %v896 = vsel %vm169, 0.0, %v895
    %v897 = vrot.slane %v70, 4
    %v898 = vsel %vm169, 0.0, %v897
    %v900 = vunpack.c.l.s4 1983009808
    %v901 = vunpack.c.0.s8 %v900
    %v902 = vperm.slane %v70, %v901
    %v904 = vunpack.c.l.s4 1983009808
    %v905 = vunpack.c.0.s8 %v904
    %v906 = vperm.slane %v898, %v905
    %v907 = vrot.slane %v134, 4
    %v908 = vsel %vm169, 0.0, %v907
    %v910 = vunpack.c.l.s4 1983009808
    %v911 = vunpack.c.0.s8 %v910
    %v912 = vperm.slane %v134, %v911
    %v914 = vunpack.c.l.s4 1983009808
    %v915 = vunpack.c.0.s8 %v914
    %v916 = vperm.slane %v908, %v915
    %v917 = vrot.slane %v912, 4
    %v918 = vsel %vm169, %v917, %v902
    %v919 = vrot.slane %v902, 4
    %v920 = vsel %vm169, %v912, %v919
    %v922 = vunpack.c.l.s4 1934713408
    %v923 = vunpack.c.0.s8 %v922
    %v924 = vperm.slane %v918, %v923
    %v926 = vunpack.c.l.s4 1934713408
    %v927 = vunpack.c.0.s8 %v926
    %v928 = vperm.slane %v920, %v927
    %v929 = vrot.slane %v916, 4
    %v930 = vsel %vm169, %v929, %v906
    %v931 = vrot.slane %v906, 4
    %v932 = vsel %vm169, %v916, %v931
    %v934 = vunpack.c.l.s4 1934713408
    %v935 = vunpack.c.0.s8 %v934
    %v936 = vperm.slane %v930, %v935
    %v938 = vunpack.c.l.s4 1934713408
    %v939 = vunpack.c.0.s8 %v938
    %v940 = vperm.slane %v932, %v939
    %v941 = vrot.slane %v924, 4
    %v942 = vsel %vm169, 0.0, %v941
    %v943 = vrot.slane %v928, 4
    %v944 = vsel %vm169, 0.0, %v943
    %v945 = vrot.slane %v936, 4
    %v946 = vsel %vm169, 0.0, %v945
    %v947 = vrot.slane %v940, 4
    %v948 = vsel %vm169, 0.0, %v947
    %v949 = vrot.slane %v71, 4
    %v950 = vsel %vm169, 0.0, %v949
    %v952 = vunpack.c.l.s4 1983009808
    %v953 = vunpack.c.0.s8 %v952
    %v954 = vperm.slane %v71, %v953
    %v956 = vunpack.c.l.s4 1983009808
    %v957 = vunpack.c.0.s8 %v956
    %v958 = vperm.slane %v950, %v957
    %v959 = vrot.slane %v135, 4
    %v960 = vsel %vm169, 0.0, %v959
    %v962 = vunpack.c.l.s4 1983009808
    %v963 = vunpack.c.0.s8 %v962
    %v964 = vperm.slane %v135, %v963
    %v966 = vunpack.c.l.s4 1983009808
    %v967 = vunpack.c.0.s8 %v966
    %v968 = vperm.slane %v960, %v967
    %v969 = vrot.slane %v964, 4
    %v970 = vsel %vm169, %v969, %v954
    %v971 = vrot.slane %v954, 4
    %v972 = vsel %vm169, %v964, %v971
    %v974 = vunpack.c.l.s4 1934713408
    %v975 = vunpack.c.0.s8 %v974
    %v976 = vperm.slane %v970, %v975
    %v978 = vunpack.c.l.s4 1934713408
    %v979 = vunpack.c.0.s8 %v978
    %v980 = vperm.slane %v972, %v979
    %v981 = vrot.slane %v968, 4
    %v982 = vsel %vm169, %v981, %v958
    %v983 = vrot.slane %v958, 4
    %v984 = vsel %vm169, %v968, %v983
    %v986 = vunpack.c.l.s4 1934713408
    %v987 = vunpack.c.0.s8 %v986
    %v988 = vperm.slane %v982, %v987
    %v990 = vunpack.c.l.s4 1934713408
    %v991 = vunpack.c.0.s8 %v990
    %v992 = vperm.slane %v984, %v991
    %v993 = vrot.slane %v976, 4
    %v994 = vsel %vm169, 0.0, %v993
    %v995 = vrot.slane %v980, 4
    %v996 = vsel %vm169, 0.0, %v995
    %v997 = vrot.slane %v988, 4
    %v998 = vsel %vm169, 0.0, %v997
    %v999 = vrot.slane %v992, 4
    %v1000 = vsel %vm169, 0.0, %v999
    %v1001 = vrot.slane %v88, 4
    %v1002 = vsel %vm169, 0.0, %v1001
    %v1004 = vunpack.c.l.s4 1983009808
    %v1005 = vunpack.c.0.s8 %v1004
    %v1006 = vperm.slane %v88, %v1005
    %v1008 = vunpack.c.l.s4 1983009808
    %v1009 = vunpack.c.0.s8 %v1008
    %v1010 = vperm.slane %v1002, %v1009
    %v1011 = vrot.slane %v152, 4
    %v1012 = vsel %vm169, 0.0, %v1011
    %v1014 = vunpack.c.l.s4 1983009808
    %v1015 = vunpack.c.0.s8 %v1014
    %v1016 = vperm.slane %v152, %v1015
    %v1018 = vunpack.c.l.s4 1983009808
    %v1019 = vunpack.c.0.s8 %v1018
    %v1020 = vperm.slane %v1012, %v1019
    %v1021 = vrot.slane %v1016, 4
    %v1022 = vsel %vm169, %v1021, %v1006
    %v1023 = vrot.slane %v1006, 4
    %v1024 = vsel %vm169, %v1016, %v1023
    %v1026 = vunpack.c.l.s4 1934713408
    %v1027 = vunpack.c.0.s8 %v1026
    %v1028 = vperm.slane %v1022, %v1027
    %v1030 = vunpack.c.l.s4 1934713408
    %v1031 = vunpack.c.0.s8 %v1030
    %v1032 = vperm.slane %v1024, %v1031
    %v1033 = vrot.slane %v1020, 4
    %v1034 = vsel %vm169, %v1033, %v1010
    %v1035 = vrot.slane %v1010, 4
    %v1036 = vsel %vm169, %v1020, %v1035
    %v1038 = vunpack.c.l.s4 1934713408
    %v1039 = vunpack.c.0.s8 %v1038
    %v1040 = vperm.slane %v1034, %v1039
    %v1042 = vunpack.c.l.s4 1934713408
    %v1043 = vunpack.c.0.s8 %v1042
    %v1044 = vperm.slane %v1036, %v1043
    %v1045 = vrot.slane %v1028, 4
    %v1046 = vsel %vm169, 0.0, %v1045
    %v1047 = vrot.slane %v1032, 4
    %v1048 = vsel %vm169, 0.0, %v1047
    %v1049 = vrot.slane %v1040, 4
    %v1050 = vsel %vm169, 0.0, %v1049
    %v1051 = vrot.slane %v1044, 4
    %v1052 = vsel %vm169, 0.0, %v1051
    %v1053 = vrot.slane %v89, 4
    %v1054 = vsel %vm169, 0.0, %v1053
    %v1056 = vunpack.c.l.s4 1983009808
    %v1057 = vunpack.c.0.s8 %v1056
    %v1058 = vperm.slane %v89, %v1057
    %v1060 = vunpack.c.l.s4 1983009808
    %v1061 = vunpack.c.0.s8 %v1060
    %v1062 = vperm.slane %v1054, %v1061
    %v1063 = vrot.slane %v153, 4
    %v1064 = vsel %vm169, 0.0, %v1063
    %v1066 = vunpack.c.l.s4 1983009808
    %v1067 = vunpack.c.0.s8 %v1066
    %v1068 = vperm.slane %v153, %v1067
    %v1070 = vunpack.c.l.s4 1983009808
    %v1071 = vunpack.c.0.s8 %v1070
    %v1072 = vperm.slane %v1064, %v1071
    %v1073 = vrot.slane %v1068, 4
    %v1074 = vsel %vm169, %v1073, %v1058
    %v1075 = vrot.slane %v1058, 4
    %v1076 = vsel %vm169, %v1068, %v1075
    %v1078 = vunpack.c.l.s4 1934713408
    %v1079 = vunpack.c.0.s8 %v1078
    %v1080 = vperm.slane %v1074, %v1079
    %v1082 = vunpack.c.l.s4 1934713408
    %v1083 = vunpack.c.0.s8 %v1082
    %v1084 = vperm.slane %v1076, %v1083
    %v1085 = vrot.slane %v1072, 4
    %v1086 = vsel %vm169, %v1085, %v1062
    %v1087 = vrot.slane %v1062, 4
    %v1088 = vsel %vm169, %v1072, %v1087
    %v1090 = vunpack.c.l.s4 1934713408
    %v1091 = vunpack.c.0.s8 %v1090
    %v1092 = vperm.slane %v1086, %v1091
    %v1094 = vunpack.c.l.s4 1934713408
    %v1095 = vunpack.c.0.s8 %v1094
    %v1096 = vperm.slane %v1088, %v1095
    %v1097 = vrot.slane %v1080, 4
    %v1098 = vsel %vm169, 0.0, %v1097
    %v1099 = vrot.slane %v1084, 4
    %v1100 = vsel %vm169, 0.0, %v1099
    %v1101 = vrot.slane %v1092, 4
    %v1102 = vsel %vm169, 0.0, %v1101
    %v1103 = vrot.slane %v1096, 4
    %v1104 = vsel %vm169, 0.0, %v1103
    %v1105 = vrot.slane %v90, 4
    %v1106 = vsel %vm169, 0.0, %v1105
    %v1108 = vunpack.c.l.s4 1983009808
    %v1109 = vunpack.c.0.s8 %v1108
    %v1110 = vperm.slane %v90, %v1109
    %v1112 = vunpack.c.l.s4 1983009808
    %v1113 = vunpack.c.0.s8 %v1112
    %v1114 = vperm.slane %v1106, %v1113
    %v1115 = vrot.slane %v154, 4
    %v1116 = vsel %vm169, 0.0, %v1115
    %v1118 = vunpack.c.l.s4 1983009808
    %v1119 = vunpack.c.0.s8 %v1118
    %v1120 = vperm.slane %v154, %v1119
    %v1122 = vunpack.c.l.s4 1983009808
    %v1123 = vunpack.c.0.s8 %v1122
    %v1124 = vperm.slane %v1116, %v1123
    %v1125 = vrot.slane %v1120, 4
    %v1126 = vsel %vm169, %v1125, %v1110
    %v1127 = vrot.slane %v1110, 4
    %v1128 = vsel %vm169, %v1120, %v1127
    %v1130 = vunpack.c.l.s4 1934713408
    %v1131 = vunpack.c.0.s8 %v1130
    %v1132 = vperm.slane %v1126, %v1131
    %v1134 = vunpack.c.l.s4 1934713408
    %v1135 = vunpack.c.0.s8 %v1134
    %v1136 = vperm.slane %v1128, %v1135
    %v1137 = vrot.slane %v1124, 4
    %v1138 = vsel %vm169, %v1137, %v1114
    %v1139 = vrot.slane %v1114, 4
    %v1140 = vsel %vm169, %v1124, %v1139
    %v1142 = vunpack.c.l.s4 1934713408
    %v1143 = vunpack.c.0.s8 %v1142
    %v1144 = vperm.slane %v1138, %v1143
    %v1146 = vunpack.c.l.s4 1934713408
    %v1147 = vunpack.c.0.s8 %v1146
    %v1148 = vperm.slane %v1140, %v1147
    %v1149 = vrot.slane %v1132, 4
    %v1150 = vsel %vm169, 0.0, %v1149
    %v1151 = vrot.slane %v1136, 4
    %v1152 = vsel %vm169, 0.0, %v1151
    %v1153 = vrot.slane %v1144, 4
    %v1154 = vsel %vm169, 0.0, %v1153
    %v1155 = vrot.slane %v1148, 4
    %v1156 = vsel %vm169, 0.0, %v1155
    %v1157 = vrot.slane %v91, 4
    %v1158 = vsel %vm169, 0.0, %v1157
    %v1160 = vunpack.c.l.s4 1983009808
    %v1161 = vunpack.c.0.s8 %v1160
    %v1162 = vperm.slane %v91, %v1161
    %v1164 = vunpack.c.l.s4 1983009808
    %v1165 = vunpack.c.0.s8 %v1164
    %v1166 = vperm.slane %v1158, %v1165
    %v1167 = vrot.slane %v155, 4
    %v1168 = vsel %vm169, 0.0, %v1167
    %v1170 = vunpack.c.l.s4 1983009808
    %v1171 = vunpack.c.0.s8 %v1170
    %v1172 = vperm.slane %v155, %v1171
    %v1174 = vunpack.c.l.s4 1983009808
    %v1175 = vunpack.c.0.s8 %v1174
    %v1176 = vperm.slane %v1168, %v1175
    %v1177 = vrot.slane %v1172, 4
    %v1178 = vsel %vm169, %v1177, %v1162
    %v1179 = vrot.slane %v1162, 4
    %v1180 = vsel %vm169, %v1172, %v1179
    %v1182 = vunpack.c.l.s4 1934713408
    %v1183 = vunpack.c.0.s8 %v1182
    %v1184 = vperm.slane %v1178, %v1183
    %v1186 = vunpack.c.l.s4 1934713408
    %v1187 = vunpack.c.0.s8 %v1186
    %v1188 = vperm.slane %v1180, %v1187
    %v1189 = vrot.slane %v1176, 4
    %v1190 = vsel %vm169, %v1189, %v1166
    %v1191 = vrot.slane %v1166, 4
    %v1192 = vsel %vm169, %v1176, %v1191
    %v1194 = vunpack.c.l.s4 1934713408
    %v1195 = vunpack.c.0.s8 %v1194
    %v1196 = vperm.slane %v1190, %v1195
    %v1198 = vunpack.c.l.s4 1934713408
    %v1199 = vunpack.c.0.s8 %v1198
    %v1200 = vperm.slane %v1192, %v1199
    %v1201 = vrot.slane %v1184, 4
    %v1202 = vsel %vm169, 0.0, %v1201
    %v1203 = vrot.slane %v1188, 4
    %v1204 = vsel %vm169, 0.0, %v1203
    %v1205 = vrot.slane %v1196, 4
    %v1206 = vsel %vm169, 0.0, %v1205
    %v1207 = vrot.slane %v1200, 4
    %v1208 = vsel %vm169, 0.0, %v1207
    %v1209 = vrot.slane %v92, 4
    %v1210 = vsel %vm169, 0.0, %v1209
    %v1212 = vunpack.c.l.s4 1983009808
    %v1213 = vunpack.c.0.s8 %v1212
    %v1214 = vperm.slane %v92, %v1213
    %v1216 = vunpack.c.l.s4 1983009808
    %v1217 = vunpack.c.0.s8 %v1216
    %v1218 = vperm.slane %v1210, %v1217
    %v1219 = vrot.slane %v156, 4
    %v1220 = vsel %vm169, 0.0, %v1219
    %v1222 = vunpack.c.l.s4 1983009808
    %v1223 = vunpack.c.0.s8 %v1222
    %v1224 = vperm.slane %v156, %v1223
    %v1226 = vunpack.c.l.s4 1983009808
    %v1227 = vunpack.c.0.s8 %v1226
    %v1228 = vperm.slane %v1220, %v1227
    %v1229 = vrot.slane %v1224, 4
    %v1230 = vsel %vm169, %v1229, %v1214
    %v1231 = vrot.slane %v1214, 4
    %v1232 = vsel %vm169, %v1224, %v1231
    %v1234 = vunpack.c.l.s4 1934713408
    %v1235 = vunpack.c.0.s8 %v1234
    %v1236 = vperm.slane %v1230, %v1235
    %v1238 = vunpack.c.l.s4 1934713408
    %v1239 = vunpack.c.0.s8 %v1238
    %v1240 = vperm.slane %v1232, %v1239
    %v1241 = vrot.slane %v1228, 4
    %v1242 = vsel %vm169, %v1241, %v1218
    %v1243 = vrot.slane %v1218, 4
    %v1244 = vsel %vm169, %v1228, %v1243
    %v1246 = vunpack.c.l.s4 1934713408
    %v1247 = vunpack.c.0.s8 %v1246
    %v1248 = vperm.slane %v1242, %v1247
    %v1250 = vunpack.c.l.s4 1934713408
    %v1251 = vunpack.c.0.s8 %v1250
    %v1252 = vperm.slane %v1244, %v1251
    %v1253 = vrot.slane %v1236, 4
    %v1254 = vsel %vm169, 0.0, %v1253
    %v1255 = vrot.slane %v1240, 4
    %v1256 = vsel %vm169, 0.0, %v1255
    %v1257 = vrot.slane %v1248, 4
    %v1258 = vsel %vm169, 0.0, %v1257
    %v1259 = vrot.slane %v1252, 4
    %v1260 = vsel %vm169, 0.0, %v1259
    %v1261 = vrot.slane %v93, 4
    %v1262 = vsel %vm169, 0.0, %v1261
    %v1264 = vunpack.c.l.s4 1983009808
    %v1265 = vunpack.c.0.s8 %v1264
    %v1266 = vperm.slane %v93, %v1265
    %v1268 = vunpack.c.l.s4 1983009808
    %v1269 = vunpack.c.0.s8 %v1268
    %v1270 = vperm.slane %v1262, %v1269
    %v1271 = vrot.slane %v157, 4
    %v1272 = vsel %vm169, 0.0, %v1271
    %v1274 = vunpack.c.l.s4 1983009808
    %v1275 = vunpack.c.0.s8 %v1274
    %v1276 = vperm.slane %v157, %v1275
    %v1278 = vunpack.c.l.s4 1983009808
    %v1279 = vunpack.c.0.s8 %v1278
    %v1280 = vperm.slane %v1272, %v1279
    %v1281 = vrot.slane %v1276, 4
    %v1282 = vsel %vm169, %v1281, %v1266
    %v1283 = vrot.slane %v1266, 4
    %v1284 = vsel %vm169, %v1276, %v1283
    %v1286 = vunpack.c.l.s4 1934713408
    %v1287 = vunpack.c.0.s8 %v1286
    %v1288 = vperm.slane %v1282, %v1287
    %v1290 = vunpack.c.l.s4 1934713408
    %v1291 = vunpack.c.0.s8 %v1290
    %v1292 = vperm.slane %v1284, %v1291
    %v1293 = vrot.slane %v1280, 4
    %v1294 = vsel %vm169, %v1293, %v1270
    %v1295 = vrot.slane %v1270, 4
    %v1296 = vsel %vm169, %v1280, %v1295
    %v1298 = vunpack.c.l.s4 1934713408
    %v1299 = vunpack.c.0.s8 %v1298
    %v1300 = vperm.slane %v1294, %v1299
    %v1302 = vunpack.c.l.s4 1934713408
    %v1303 = vunpack.c.0.s8 %v1302
    %v1304 = vperm.slane %v1296, %v1303
    %v1305 = vrot.slane %v1288, 4
    %v1306 = vsel %vm169, 0.0, %v1305
    %v1307 = vrot.slane %v1292, 4
    %v1308 = vsel %vm169, 0.0, %v1307
    %v1309 = vrot.slane %v1300, 4
    %v1310 = vsel %vm169, 0.0, %v1309
    %v1311 = vrot.slane %v1304, 4
    %v1312 = vsel %vm169, 0.0, %v1311
    %v1313 = vrot.slane %v94, 4
    %v1314 = vsel %vm169, 0.0, %v1313
    %v1316 = vunpack.c.l.s4 1983009808
    %v1317 = vunpack.c.0.s8 %v1316
    %v1318 = vperm.slane %v94, %v1317
    %v1320 = vunpack.c.l.s4 1983009808
    %v1321 = vunpack.c.0.s8 %v1320
    %v1322 = vperm.slane %v1314, %v1321
    %v1323 = vrot.slane %v158, 4
    %v1324 = vsel %vm169, 0.0, %v1323
    %v1326 = vunpack.c.l.s4 1983009808
    %v1327 = vunpack.c.0.s8 %v1326
    %v1328 = vperm.slane %v158, %v1327
    %v1330 = vunpack.c.l.s4 1983009808
    %v1331 = vunpack.c.0.s8 %v1330
    %v1332 = vperm.slane %v1324, %v1331
    %v1333 = vrot.slane %v1328, 4
    %v1334 = vsel %vm169, %v1333, %v1318
    %v1335 = vrot.slane %v1318, 4
    %v1336 = vsel %vm169, %v1328, %v1335
    %v1338 = vunpack.c.l.s4 1934713408
    %v1339 = vunpack.c.0.s8 %v1338
    %v1340 = vperm.slane %v1334, %v1339
    %v1342 = vunpack.c.l.s4 1934713408
    %v1343 = vunpack.c.0.s8 %v1342
    %v1344 = vperm.slane %v1336, %v1343
    %v1345 = vrot.slane %v1332, 4
    %v1346 = vsel %vm169, %v1345, %v1322
    %v1347 = vrot.slane %v1322, 4
    %v1348 = vsel %vm169, %v1332, %v1347
    %v1350 = vunpack.c.l.s4 1934713408
    %v1351 = vunpack.c.0.s8 %v1350
    %v1352 = vperm.slane %v1346, %v1351
    %v1354 = vunpack.c.l.s4 1934713408
    %v1355 = vunpack.c.0.s8 %v1354
    %v1356 = vperm.slane %v1348, %v1355
    %v1357 = vrot.slane %v1340, 4
    %v1358 = vsel %vm169, 0.0, %v1357
    %v1359 = vrot.slane %v1344, 4
    %v1360 = vsel %vm169, 0.0, %v1359
    %v1361 = vrot.slane %v1352, 4
    %v1362 = vsel %vm169, 0.0, %v1361
    %v1363 = vrot.slane %v1356, 4
    %v1364 = vsel %vm169, 0.0, %v1363
    %v1365 = vrot.slane %v95, 4
    %v1366 = vsel %vm169, 0.0, %v1365
    %v1368 = vunpack.c.l.s4 1983009808
    %v1369 = vunpack.c.0.s8 %v1368
    %v1370 = vperm.slane %v95, %v1369
    %v1372 = vunpack.c.l.s4 1983009808
    %v1373 = vunpack.c.0.s8 %v1372
    %v1374 = vperm.slane %v1366, %v1373
    %v1375 = vrot.slane %v159, 4
    %v1376 = vsel %vm169, 0.0, %v1375
    %v1378 = vunpack.c.l.s4 1983009808
    %v1379 = vunpack.c.0.s8 %v1378
    %v1380 = vperm.slane %v159, %v1379
    %v1382 = vunpack.c.l.s4 1983009808
    %v1383 = vunpack.c.0.s8 %v1382
    %v1384 = vperm.slane %v1376, %v1383
    %v1385 = vrot.slane %v1380, 4
    %v1386 = vsel %vm169, %v1385, %v1370
    %v1387 = vrot.slane %v1370, 4
    %v1388 = vsel %vm169, %v1380, %v1387
    %v1390 = vunpack.c.l.s4 1934713408
    %v1391 = vunpack.c.0.s8 %v1390
    %v1392 = vperm.slane %v1386, %v1391
    %v1394 = vunpack.c.l.s4 1934713408
    %v1395 = vunpack.c.0.s8 %v1394
    %v1396 = vperm.slane %v1388, %v1395
    %v1397 = vrot.slane %v1384, 4
    %v1398 = vsel %vm169, %v1397, %v1374
    %v1399 = vrot.slane %v1374, 4
    %v1400 = vsel %vm169, %v1384, %v1399
    %v1402 = vunpack.c.l.s4 1934713408
    %v1403 = vunpack.c.0.s8 %v1402
    %v1404 = vperm.slane %v1398, %v1403
    %v1406 = vunpack.c.l.s4 1934713408
    %v1407 = vunpack.c.0.s8 %v1406
    %v1408 = vperm.slane %v1400, %v1407
    %v1409 = vrot.slane %v1392, 4
    %v1410 = vsel %vm169, 0.0, %v1409
    %v1411 = vrot.slane %v1396, 4
    %v1412 = vsel %vm169, 0.0, %v1411
    %v1413 = vrot.slane %v1404, 4
    %v1414 = vsel %vm169, 0.0, %v1413
    %v1415 = vrot.slane %v1408, 4
    %v1416 = vsel %vm169, 0.0, %v1415
    %v1417 = vrot.slane %v96, 4
    %v1418 = vsel %vm169, 0.0, %v1417
    %v1420 = vunpack.c.l.s4 1983009808
    %v1421 = vunpack.c.0.s8 %v1420
    %v1422 = vperm.slane %v96, %v1421
    %v1424 = vunpack.c.l.s4 1983009808
    %v1425 = vunpack.c.0.s8 %v1424
    %v1426 = vperm.slane %v1418, %v1425
    %v1427 = vrot.slane %v160, 4
    %v1428 = vsel %vm169, 0.0, %v1427
    %v1430 = vunpack.c.l.s4 1983009808
    %v1431 = vunpack.c.0.s8 %v1430
    %v1432 = vperm.slane %v160, %v1431
    %v1434 = vunpack.c.l.s4 1983009808
    %v1435 = vunpack.c.0.s8 %v1434
    %v1436 = vperm.slane %v1428, %v1435
    %v1437 = vrot.slane %v1432, 4
    %v1438 = vsel %vm169, %v1437, %v1422
    %v1439 = vrot.slane %v1422, 4
    %v1440 = vsel %vm169, %v1432, %v1439
    %v1442 = vunpack.c.l.s4 1934713408
    %v1443 = vunpack.c.0.s8 %v1442
    %v1444 = vperm.slane %v1438, %v1443
    %v1446 = vunpack.c.l.s4 1934713408
    %v1447 = vunpack.c.0.s8 %v1446
    %v1448 = vperm.slane %v1440, %v1447
    %v1449 = vrot.slane %v1436, 4
    %v1450 = vsel %vm169, %v1449, %v1426
    %v1451 = vrot.slane %v1426, 4
    %v1452 = vsel %vm169, %v1436, %v1451
    %v1454 = vunpack.c.l.s4 1934713408
    %v1455 = vunpack.c.0.s8 %v1454
    %v1456 = vperm.slane %v1450, %v1455
    %v1458 = vunpack.c.l.s4 1934713408
    %v1459 = vunpack.c.0.s8 %v1458
    %v1460 = vperm.slane %v1452, %v1459
    %v1461 = vrot.slane %v1444, 4
    %v1462 = vsel %vm169, 0.0, %v1461
    %v1463 = vrot.slane %v1448, 4
    %v1464 = vsel %vm169, 0.0, %v1463
    %v1465 = vrot.slane %v1456, 4
    %v1466 = vsel %vm169, 0.0, %v1465
    %v1467 = vrot.slane %v1460, 4
    %v1468 = vsel %vm169, 0.0, %v1467
    %v1469 = vrot.slane %v97, 4
    %v1470 = vsel %vm169, 0.0, %v1469
    %v1472 = vunpack.c.l.s4 1983009808
    %v1473 = vunpack.c.0.s8 %v1472
    %v1474 = vperm.slane %v97, %v1473
    %v1476 = vunpack.c.l.s4 1983009808
    %v1477 = vunpack.c.0.s8 %v1476
    %v1478 = vperm.slane %v1470, %v1477
    %v1479 = vrot.slane %v161, 4
    %v1480 = vsel %vm169, 0.0, %v1479
    %v1482 = vunpack.c.l.s4 1983009808
    %v1483 = vunpack.c.0.s8 %v1482
    %v1484 = vperm.slane %v161, %v1483
    %v1486 = vunpack.c.l.s4 1983009808
    %v1487 = vunpack.c.0.s8 %v1486
    %v1488 = vperm.slane %v1480, %v1487
    %v1489 = vrot.slane %v1484, 4
    %v1490 = vsel %vm169, %v1489, %v1474
    %v1491 = vrot.slane %v1474, 4
    %v1492 = vsel %vm169, %v1484, %v1491
    %v1494 = vunpack.c.l.s4 1934713408
    %v1495 = vunpack.c.0.s8 %v1494
    %v1496 = vperm.slane %v1490, %v1495
    %v1498 = vunpack.c.l.s4 1934713408
    %v1499 = vunpack.c.0.s8 %v1498
    %v1500 = vperm.slane %v1492, %v1499
    %v1501 = vrot.slane %v1488, 4
    %v1502 = vsel %vm169, %v1501, %v1478
    %v1503 = vrot.slane %v1478, 4
    %v1504 = vsel %vm169, %v1488, %v1503
    %v1506 = vunpack.c.l.s4 1934713408
    %v1507 = vunpack.c.0.s8 %v1506
    %v1508 = vperm.slane %v1502, %v1507
    %v1510 = vunpack.c.l.s4 1934713408
    %v1511 = vunpack.c.0.s8 %v1510
    %v1512 = vperm.slane %v1504, %v1511
    %v1513 = vrot.slane %v1496, 4
    %v1514 = vsel %vm169, 0.0, %v1513
    %v1515 = vrot.slane %v1500, 4
    %v1516 = vsel %vm169, 0.0, %v1515
    %v1517 = vrot.slane %v1508, 4
    %v1518 = vsel %vm169, 0.0, %v1517
    %v1519 = vrot.slane %v1512, 4
    %v1520 = vsel %vm169, 0.0, %v1519
    %v1521 = vrot.slane %v98, 4
    %v1522 = vsel %vm169, 0.0, %v1521
    %v1524 = vunpack.c.l.s4 1983009808
    %v1525 = vunpack.c.0.s8 %v1524
    %v1526 = vperm.slane %v98, %v1525
    %v1528 = vunpack.c.l.s4 1983009808
    %v1529 = vunpack.c.0.s8 %v1528
    %v1530 = vperm.slane %v1522, %v1529
    %v1531 = vrot.slane %v162, 4
    %v1532 = vsel %vm169, 0.0, %v1531
    %v1534 = vunpack.c.l.s4 1983009808
    %v1535 = vunpack.c.0.s8 %v1534
    %v1536 = vperm.slane %v162, %v1535
    %v1538 = vunpack.c.l.s4 1983009808
    %v1539 = vunpack.c.0.s8 %v1538
    %v1540 = vperm.slane %v1532, %v1539
    %v1541 = vrot.slane %v1536, 4
    %v1542 = vsel %vm169, %v1541, %v1526
    %v1543 = vrot.slane %v1526, 4
    %v1544 = vsel %vm169, %v1536, %v1543
    %v1546 = vunpack.c.l.s4 1934713408
    %v1547 = vunpack.c.0.s8 %v1546
    %v1548 = vperm.slane %v1542, %v1547
    %v1550 = vunpack.c.l.s4 1934713408
    %v1551 = vunpack.c.0.s8 %v1550
    %v1552 = vperm.slane %v1544, %v1551
    %v1553 = vrot.slane %v1540, 4
    %v1554 = vsel %vm169, %v1553, %v1530
    %v1555 = vrot.slane %v1530, 4
    %v1556 = vsel %vm169, %v1540, %v1555
    %v1558 = vunpack.c.l.s4 1934713408
    %v1559 = vunpack.c.0.s8 %v1558
    %v1560 = vperm.slane %v1554, %v1559
    %v1562 = vunpack.c.l.s4 1934713408
    %v1563 = vunpack.c.0.s8 %v1562
    %v1564 = vperm.slane %v1556, %v1563
    %v1565 = vrot.slane %v1548, 4
    %v1566 = vsel %vm169, 0.0, %v1565
    %v1567 = vrot.slane %v1552, 4
    %v1568 = vsel %vm169, 0.0, %v1567
    %v1569 = vrot.slane %v1560, 4
    %v1570 = vsel %vm169, 0.0, %v1569
    %v1571 = vrot.slane %v1564, 4
    %v1572 = vsel %vm169, 0.0, %v1571
    %v1573 = vrot.slane %v99, 4
    %v1574 = vsel %vm169, 0.0, %v1573
    %v1576 = vunpack.c.l.s4 1983009808
    %v1577 = vunpack.c.0.s8 %v1576
    %v1578 = vperm.slane %v99, %v1577
    %v1580 = vunpack.c.l.s4 1983009808
    %v1581 = vunpack.c.0.s8 %v1580
    %v1582 = vperm.slane %v1574, %v1581
    %v1583 = vrot.slane %v163, 4
    %v1584 = vsel %vm169, 0.0, %v1583
    %v1586 = vunpack.c.l.s4 1983009808
    %v1587 = vunpack.c.0.s8 %v1586
    %v1588 = vperm.slane %v163, %v1587
    %v1590 = vunpack.c.l.s4 1983009808
    %v1591 = vunpack.c.0.s8 %v1590
    %v1592 = vperm.slane %v1584, %v1591
    %v1593 = vrot.slane %v1588, 4
    %v1594 = vsel %vm169, %v1593, %v1578
    %v1595 = vrot.slane %v1578, 4
    %v1596 = vsel %vm169, %v1588, %v1595
    %v1598 = vunpack.c.l.s4 1934713408
    %v1599 = vunpack.c.0.s8 %v1598
    %v1600 = vperm.slane %v1594, %v1599
    %v1602 = vunpack.c.l.s4 1934713408
    %v1603 = vunpack.c.0.s8 %v1602
    %v1604 = vperm.slane %v1596, %v1603
    %v1605 = vrot.slane %v1592, 4
    %v1606 = vsel %vm169, %v1605, %v1582
    %v1607 = vrot.slane %v1582, 4
    %v1608 = vsel %vm169, %v1592, %v1607
    %v1610 = vunpack.c.l.s4 1934713408
    %v1611 = vunpack.c.0.s8 %v1610
    %v1612 = vperm.slane %v1606, %v1611
    %v1614 = vunpack.c.l.s4 1934713408
    %v1615 = vunpack.c.0.s8 %v1614
    %v1616 = vperm.slane %v1608, %v1615
    %v1617 = vrot.slane %v1600, 4
    %v1618 = vsel %vm169, 0.0, %v1617
    %v1619 = vrot.slane %v1604, 4
    %v1620 = vsel %vm169, 0.0, %v1619
    %v1621 = vrot.slane %v1612, 4
    %v1622 = vsel %vm169, 0.0, %v1621
    %v1623 = vrot.slane %v1616, 4
    %v1624 = vsel %vm169, 0.0, %v1623
    %v1625 = vrot.slane %v100, 4
    %v1626 = vsel %vm169, 0.0, %v1625
    %v1628 = vunpack.c.l.s4 1983009808
    %v1629 = vunpack.c.0.s8 %v1628
    %v1630 = vperm.slane %v100, %v1629
    %v1632 = vunpack.c.l.s4 1983009808
    %v1633 = vunpack.c.0.s8 %v1632
    %v1634 = vperm.slane %v1626, %v1633
    %v1635 = vrot.slane %v164, 4
    %v1636 = vsel %vm169, 0.0, %v1635
    %v1638 = vunpack.c.l.s4 1983009808
    %v1639 = vunpack.c.0.s8 %v1638
    %v1640 = vperm.slane %v164, %v1639
    %v1642 = vunpack.c.l.s4 1983009808
    %v1643 = vunpack.c.0.s8 %v1642
    %v1644 = vperm.slane %v1636, %v1643
    %v1645 = vrot.slane %v1640, 4
    %v1646 = vsel %vm169, %v1645, %v1630
    %v1647 = vrot.slane %v1630, 4
    %v1648 = vsel %vm169, %v1640, %v1647
    %v1650 = vunpack.c.l.s4 1934713408
    %v1651 = vunpack.c.0.s8 %v1650
    %v1652 = vperm.slane %v1646, %v1651
    %v1654 = vunpack.c.l.s4 1934713408
    %v1655 = vunpack.c.0.s8 %v1654
    %v1656 = vperm.slane %v1648, %v1655
    %v1657 = vrot.slane %v1644, 4
    %v1658 = vsel %vm169, %v1657, %v1634
    %v1659 = vrot.slane %v1634, 4
    %v1660 = vsel %vm169, %v1644, %v1659
    %v1662 = vunpack.c.l.s4 1934713408
    %v1663 = vunpack.c.0.s8 %v1662
    %v1664 = vperm.slane %v1658, %v1663
    %v1666 = vunpack.c.l.s4 1934713408
    %v1667 = vunpack.c.0.s8 %v1666
    %v1668 = vperm.slane %v1660, %v1667
    %v1669 = vrot.slane %v1652, 4
    %v1670 = vsel %vm169, 0.0, %v1669
    %v1671 = vrot.slane %v1656, 4
    %v1672 = vsel %vm169, 0.0, %v1671
    %v1673 = vrot.slane %v1664, 4
    %v1674 = vsel %vm169, 0.0, %v1673
    %v1675 = vrot.slane %v1668, 4
    %v1676 = vsel %vm169, 0.0, %v1675
    %v1677 = vrot.slane %v101, 4
    %v1678 = vsel %vm169, 0.0, %v1677
    %v1680 = vunpack.c.l.s4 1983009808
    %v1681 = vunpack.c.0.s8 %v1680
    %v1682 = vperm.slane %v101, %v1681
    %v1684 = vunpack.c.l.s4 1983009808
    %v1685 = vunpack.c.0.s8 %v1684
    %v1686 = vperm.slane %v1678, %v1685
    %v1687 = vrot.slane %v165, 4
    %v1688 = vsel %vm169, 0.0, %v1687
    %v1690 = vunpack.c.l.s4 1983009808
    %v1691 = vunpack.c.0.s8 %v1690
    %v1692 = vperm.slane %v165, %v1691
    %v1694 = vunpack.c.l.s4 1983009808
    %v1695 = vunpack.c.0.s8 %v1694
    %v1696 = vperm.slane %v1688, %v1695
    %v1697 = vrot.slane %v1692, 4
    %v1698 = vsel %vm169, %v1697, %v1682
    %v1699 = vrot.slane %v1682, 4
    %v1700 = vsel %vm169, %v1692, %v1699
    %v1702 = vunpack.c.l.s4 1934713408
    %v1703 = vunpack.c.0.s8 %v1702
    %v1704 = vperm.slane %v1698, %v1703
    %v1706 = vunpack.c.l.s4 1934713408
    %v1707 = vunpack.c.0.s8 %v1706
    %v1708 = vperm.slane %v1700, %v1707
    %v1709 = vrot.slane %v1696, 4
    %v1710 = vsel %vm169, %v1709, %v1686
    %v1711 = vrot.slane %v1686, 4
    %v1712 = vsel %vm169, %v1696, %v1711
    %v1714 = vunpack.c.l.s4 1934713408
    %v1715 = vunpack.c.0.s8 %v1714
    %v1716 = vperm.slane %v1710, %v1715
    %v1718 = vunpack.c.l.s4 1934713408
    %v1719 = vunpack.c.0.s8 %v1718
    %v1720 = vperm.slane %v1712, %v1719
    %v1721 = vrot.slane %v1704, 4
    %v1722 = vsel %vm169, 0.0, %v1721
    %v1723 = vrot.slane %v1708, 4
    %v1724 = vsel %vm169, 0.0, %v1723
    %v1725 = vrot.slane %v1716, 4
    %v1726 = vsel %vm169, 0.0, %v1725
    %v1727 = vrot.slane %v1720, 4
    %v1728 = vsel %vm169, 0.0, %v1727
    %v1729 = vrot.slane %v102, 4
    %v1730 = vsel %vm169, 0.0, %v1729
    %v1732 = vunpack.c.l.s4 1983009808
    %v1733 = vunpack.c.0.s8 %v1732
    %v1734 = vperm.slane %v102, %v1733
    %v1736 = vunpack.c.l.s4 1983009808
    %v1737 = vunpack.c.0.s8 %v1736
    %v1738 = vperm.slane %v1730, %v1737
    %v1739 = vrot.slane %v166, 4
    %v1740 = vsel %vm169, 0.0, %v1739
    %v1742 = vunpack.c.l.s4 1983009808
    %v1743 = vunpack.c.0.s8 %v1742
    %v1744 = vperm.slane %v166, %v1743
    %v1746 = vunpack.c.l.s4 1983009808
    %v1747 = vunpack.c.0.s8 %v1746
    %v1748 = vperm.slane %v1740, %v1747
    %v1749 = vrot.slane %v1744, 4
    %v1750 = vsel %vm169, %v1749, %v1734
    %v1751 = vrot.slane %v1734, 4
    %v1752 = vsel %vm169, %v1744, %v1751
    %v1754 = vunpack.c.l.s4 1934713408
    %v1755 = vunpack.c.0.s8 %v1754
    %v1756 = vperm.slane %v1750, %v1755
    %v1758 = vunpack.c.l.s4 1934713408
    %v1759 = vunpack.c.0.s8 %v1758
    %v1760 = vperm.slane %v1752, %v1759
    %v1761 = vrot.slane %v1748, 4
    %v1762 = vsel %vm169, %v1761, %v1738
    %v1763 = vrot.slane %v1738, 4
    %v1764 = vsel %vm169, %v1748, %v1763
    %v1766 = vunpack.c.l.s4 1934713408
    %v1767 = vunpack.c.0.s8 %v1766
    %v1768 = vperm.slane %v1762, %v1767
    %v1770 = vunpack.c.l.s4 1934713408
    %v1771 = vunpack.c.0.s8 %v1770
    %v1772 = vperm.slane %v1764, %v1771
    %v1773 = vrot.slane %v1756, 4
    %v1774 = vsel %vm169, 0.0, %v1773
    %v1775 = vrot.slane %v1760, 4
    %v1776 = vsel %vm169, 0.0, %v1775
    %v1777 = vrot.slane %v1768, 4
    %v1778 = vsel %vm169, 0.0, %v1777
    %v1779 = vrot.slane %v1772, 4
    %v1780 = vsel %vm169, 0.0, %v1779
    %v1781 = vrot.slane %v103, 4
    %v1782 = vsel %vm169, 0.0, %v1781
    %v1784 = vunpack.c.l.s4 1983009808
    %v1785 = vunpack.c.0.s8 %v1784
    %v1786 = vperm.slane %v103, %v1785
    %v1788 = vunpack.c.l.s4 1983009808
    %v1789 = vunpack.c.0.s8 %v1788
    %v1790 = vperm.slane %v1782, %v1789
    %v1791 = vrot.slane %v167, 4
    %v1792 = vsel %vm169, 0.0, %v1791
    %v1794 = vunpack.c.l.s4 1983009808
    %v1795 = vunpack.c.0.s8 %v1794
    %v1796 = vperm.slane %v167, %v1795
    %v1798 = vunpack.c.l.s4 1983009808
    %v1799 = vunpack.c.0.s8 %v1798
    %v1800 = vperm.slane %v1792, %v1799
    %v1801 = vrot.slane %v1796, 4
    %v1802 = vsel %vm169, %v1801, %v1786
    %v1803 = vrot.slane %v1786, 4
    %v1804 = vsel %vm169, %v1796, %v1803
    %v1806 = vunpack.c.l.s4 1934713408
    %v1807 = vunpack.c.0.s8 %v1806
    %v1808 = vperm.slane %v1802, %v1807
    %v1810 = vunpack.c.l.s4 1934713408
    %v1811 = vunpack.c.0.s8 %v1810
    %v1812 = vperm.slane %v1804, %v1811
    %v1813 = vrot.slane %v1800, 4
    %v1814 = vsel %vm169, %v1813, %v1790
    %v1815 = vrot.slane %v1790, 4
    %v1816 = vsel %vm169, %v1800, %v1815
    %v1818 = vunpack.c.l.s4 1934713408
    %v1819 = vunpack.c.0.s8 %v1818
    %v1820 = vperm.slane %v1814, %v1819
    %v1822 = vunpack.c.l.s4 1934713408
    %v1823 = vunpack.c.0.s8 %v1822
    %v1824 = vperm.slane %v1816, %v1823
    %v1825 = vrot.slane %v1808, 4
    %v1826 = vsel %vm169, 0.0, %v1825
    %v1827 = vrot.slane %v1812, 4
    %v1828 = vsel %vm169, 0.0, %v1827
    %v1829 = vrot.slane %v1820, 4
    %v1830 = vsel %vm169, 0.0, %v1829
    %v1831 = vrot.slane %v1824, 4
    %v1832 = vsel %vm169, 0.0, %v1831
    %1834 = vrot.lane.b32.xlu0 %v214, 4
    %v1835 = vpop.permute.xlu0 %1834
    %1838 = vrot.lane.b32.xlu0 %v200, 8
    %v1839 = vpop.permute.xlu0 %1838
    %1842 = vrot.lane.b32.xlu0 %v216, 12
    %v1843 = vpop.permute.xlu0 %1842
    %1846 = vrot.lane.b32.xlu0 %v208, 16
    %v1847 = vpop.permute.xlu0 %1846
    %1850 = vrot.lane.b32.xlu0 %v218, 20
    %v1851 = vpop.permute.xlu0 %1850
    %1854 = vrot.lane.b32.xlu0 %v212, 24
    %v1855 = vpop.permute.xlu0 %1854
    %1858 = vrot.lane.b32.xlu0 %v220, 28
    %v1859 = vpop.permute.xlu0 %1858
    %1862 = vrot.lane.b32.xlu0 %v248, 32
    %v1863 = vpop.permute.xlu0 %1862
    %1866 = vrot.lane.b32.xlu0 %v266, 36
    %v1867 = vpop.permute.xlu0 %1866
    %1870 = vrot.lane.b32.xlu0 %v252, 40
    %v1871 = vpop.permute.xlu0 %1870
    %1874 = vrot.lane.b32.xlu0 %v268, 44
    %v1875 = vpop.permute.xlu0 %1874
    %1878 = vrot.lane.b32.xlu0 %v260, 48
    %v1879 = vpop.permute.xlu0 %1878
    %1882 = vrot.lane.b32.xlu0 %v270, 52
    %v1883 = vpop.permute.xlu0 %1882
    %1886 = vrot.lane.b32.xlu0 %v264, 56
    %v1887 = vpop.permute.xlu0 %1886
    %1890 = vrot.lane.b32.xlu0 %v272, 60
    %v1891 = vpop.permute.xlu0 %1890
    %1894 = vrot.lane.b32.xlu0 %v300, 64
    %v1895 = vpop.permute.xlu0 %1894
    %1898 = vrot.lane.b32.xlu0 %v318, 68
    %v1899 = vpop.permute.xlu0 %1898
    %1902 = vrot.lane.b32.xlu0 %v304, 72
    %v1903 = vpop.permute.xlu0 %1902
    %1906 = vrot.lane.b32.xlu0 %v320, 76
    %v1907 = vpop.permute.xlu0 %1906
    %1910 = vrot.lane.b32.xlu0 %v312, 80
    %v1911 = vpop.permute.xlu0 %1910
    %1914 = vrot.lane.b32.xlu0 %v322, 84
    %v1915 = vpop.permute.xlu0 %1914
    %1918 = vrot.lane.b32.xlu0 %v316, 88
    %v1919 = vpop.permute.xlu0 %1918
    %1922 = vrot.lane.b32.xlu0 %v324, 92
    %v1923 = vpop.permute.xlu0 %1922
    %1926 = vrot.lane.b32.xlu0 %v352, 96
    %v1927 = vpop.permute.xlu0 %1926
    %1930 = vrot.lane.b32.xlu0 %v370, 100
    %v1931 = vpop.permute.xlu0 %1930
    %1934 = vrot.lane.b32.xlu0 %v356, 104
    %v1935 = vpop.permute.xlu0 %1934
    %1938 = vrot.lane.b32.xlu0 %v372, 108
    %v1939 = vpop.permute.xlu0 %1938
    %1942 = vrot.lane.b32.xlu0 %v364, 112
    %v1943 = vpop.permute.xlu0 %1942
    %1946 = vrot.lane.b32.xlu0 %v374, 116
    %v1947 = vpop.permute.xlu0 %1946
    %1950 = vrot.lane.b32.xlu0 %v368, 120
    %v1951 = vpop.permute.xlu0 %1950
    %1954 = vrot.lane.b32.xlu0 %v376, 124
    %v1955 = vpop.permute.xlu0 %1954
    %1958 = vrot.lane.b32.xlu0 %v422, 4
    %v1959 = vpop.permute.xlu0 %1958
    %1962 = vrot.lane.b32.xlu0 %v408, 8
    %v1963 = vpop.permute.xlu0 %1962
    %1966 = vrot.lane.b32.xlu0 %v424, 12
    %v1967 = vpop.permute.xlu0 %1966
    %1970 = vrot.lane.b32.xlu0 %v416, 16
    %v1971 = vpop.permute.xlu0 %1970
    %1974 = vrot.lane.b32.xlu0 %v426, 20
    %v1975 = vpop.permute.xlu0 %1974
    %1978 = vrot.lane.b32.xlu0 %v420, 24
    %v1979 = vpop.permute.xlu0 %1978
    %1982 = vrot.lane.b32.xlu0 %v428, 28
    %v1983 = vpop.permute.xlu0 %1982
    %1986 = vrot.lane.b32.xlu0 %v456, 32
    %v1987 = vpop.permute.xlu0 %1986
    %1990 = vrot.lane.b32.xlu0 %v474, 36
    %v1991 = vpop.permute.xlu0 %1990
    %1994 = vrot.lane.b32.xlu0 %v460, 40
    %v1995 = vpop.permute.xlu0 %1994
    %1998 = vrot.lane.b32.xlu0 %v476, 44
    %v1999 = vpop.permute.xlu0 %1998
    %2002 = vrot.lane.b32.xlu0 %v468, 48
    %v2003 = vpop.permute.xlu0 %2002
    %2006 = vrot.lane.b32.xlu0 %v478, 52
    %v2007 = vpop.permute.xlu0 %2006
    %2010 = vrot.lane.b32.xlu0 %v472, 56
    %v2011 = vpop.permute.xlu0 %2010
    %2014 = vrot.lane.b32.xlu0 %v480, 60
    %v2015 = vpop.permute.xlu0 %2014
    %2018 = vrot.lane.b32.xlu0 %v508, 64
    %v2019 = vpop.permute.xlu0 %2018
    %2022 = vrot.lane.b32.xlu0 %v526, 68
    %v2023 = vpop.permute.xlu0 %2022
    %2026 = vrot.lane.b32.xlu0 %v512, 72
    %v2027 = vpop.permute.xlu0 %2026
    %2030 = vrot.lane.b32.xlu0 %v528, 76
    %v2031 = vpop.permute.xlu0 %2030
    %2034 = vrot.lane.b32.xlu0 %v520, 80
    %v2035 = vpop.permute.xlu0 %2034
    %2038 = vrot.lane.b32.xlu0 %v530, 84
    %v2039 = vpop.permute.xlu0 %2038
    %2042 = vrot.lane.b32.xlu0 %v524, 88
    %v2043 = vpop.permute.xlu0 %2042
    %2046 = vrot.lane.b32.xlu0 %v532, 92
    %v2047 = vpop.permute.xlu0 %2046
    %2050 = vrot.lane.b32.xlu0 %v560, 96
    %v2051 = vpop.permute.xlu0 %2050
    %2054 = vrot.lane.b32.xlu0 %v578, 100
    %v2055 = vpop.permute.xlu0 %2054
    %2058 = vrot.lane.b32.xlu0 %v564, 104
    %v2059 = vpop.permute.xlu0 %2058
    %2062 = vrot.lane.b32.xlu0 %v580, 108
    %v2063 = vpop.permute.xlu0 %2062
    %2066 = vrot.lane.b32.xlu0 %v572, 112
    %v2067 = vpop.permute.xlu0 %2066
    %2070 = vrot.lane.b32.xlu0 %v582, 116
    %v2071 = vpop.permute.xlu0 %2070
    %2074 = vrot.lane.b32.xlu0 %v576, 120
    %v2075 = vpop.permute.xlu0 %2074
    %2078 = vrot.lane.b32.xlu0 %v584, 124
    %v2079 = vpop.permute.xlu0 %2078
    %2082 = vrot.lane.b32.xlu0 %v630, 4
    %v2083 = vpop.permute.xlu0 %2082
    %2086 = vrot.lane.b32.xlu0 %v616, 8
    %v2087 = vpop.permute.xlu0 %2086
    %2090 = vrot.lane.b32.xlu0 %v632, 12
    %v2091 = vpop.permute.xlu0 %2090
    %2094 = vrot.lane.b32.xlu0 %v624, 16
    %v2095 = vpop.permute.xlu0 %2094
    %2098 = vrot.lane.b32.xlu0 %v634, 20
    %v2099 = vpop.permute.xlu0 %2098
    %2102 = vrot.lane.b32.xlu0 %v628, 24
    %v2103 = vpop.permute.xlu0 %2102
    %2106 = vrot.lane.b32.xlu0 %v636, 28
    %v2107 = vpop.permute.xlu0 %2106
    %2110 = vrot.lane.b32.xlu0 %v664, 32
    %v2111 = vpop.permute.xlu0 %2110
    %2114 = vrot.lane.b32.xlu0 %v682, 36
    %v2115 = vpop.permute.xlu0 %2114
    %2118 = vrot.lane.b32.xlu0 %v668, 40
    %v2119 = vpop.permute.xlu0 %2118
    %2122 = vrot.lane.b32.xlu0 %v684, 44
    %v2123 = vpop.permute.xlu0 %2122
    %2126 = vrot.lane.b32.xlu0 %v676, 48
    %v2127 = vpop.permute.xlu0 %2126
    %2130 = vrot.lane.b32.xlu0 %v686, 52
    %v2131 = vpop.permute.xlu0 %2130
    %2134 = vrot.lane.b32.xlu0 %v680, 56
    %v2135 = vpop.permute.xlu0 %2134
    %2138 = vrot.lane.b32.xlu0 %v688, 60
    %v2139 = vpop.permute.xlu0 %2138
    %2142 = vrot.lane.b32.xlu0 %v716, 64
    %v2143 = vpop.permute.xlu0 %2142
    %2146 = vrot.lane.b32.xlu0 %v734, 68
    %v2147 = vpop.permute.xlu0 %2146
    %2150 = vrot.lane.b32.xlu0 %v720, 72
    %v2151 = vpop.permute.xlu0 %2150
    %2154 = vrot.lane.b32.xlu0 %v736, 76
    %v2155 = vpop.permute.xlu0 %2154
    %2158 = vrot.lane.b32.xlu0 %v728, 80
    %v2159 = vpop.permute.xlu0 %2158
    %2162 = vrot.lane.b32.xlu0 %v738, 84
    %v2163 = vpop.permute.xlu0 %2162
    %2166 = vrot.lane.b32.xlu0 %v732, 88
    %v2167 = vpop.permute.xlu0 %2166
    %2170 = vrot.lane.b32.xlu0 %v740, 92
    %v2171 = vpop.permute.xlu0 %2170
    %2174 = vrot.lane.b32.xlu0 %v768, 96
    %v2175 = vpop.permute.xlu0 %2174
    %2178 = vrot.lane.b32.xlu0 %v786, 100
    %v2179 = vpop.permute.xlu0 %2178
    %2182 = vrot.lane.b32.xlu0 %v772, 104
    %v2183 = vpop.permute.xlu0 %2182
    %2186 = vrot.lane.b32.xlu0 %v788, 108
    %v2187 = vpop.permute.xlu0 %2186
    %2190 = vrot.lane.b32.xlu0 %v780, 112
    %v2191 = vpop.permute.xlu0 %2190
    %2194 = vrot.lane.b32.xlu0 %v790, 116
    %v2195 = vpop.permute.xlu0 %2194
    %2198 = vrot.lane.b32.xlu0 %v784, 120
    %v2199 = vpop.permute.xlu0 %2198
    %2202 = vrot.lane.b32.xlu0 %v792, 124
    %v2203 = vpop.permute.xlu0 %2202
    %2206 = vrot.lane.b32.xlu0 %v838, 4
    %v2207 = vpop.permute.xlu0 %2206
    %2210 = vrot.lane.b32.xlu0 %v824, 8
    %v2211 = vpop.permute.xlu0 %2210
    %2214 = vrot.lane.b32.xlu0 %v840, 12
    %v2215 = vpop.permute.xlu0 %2214
    %2218 = vrot.lane.b32.xlu0 %v832, 16
    %v2219 = vpop.permute.xlu0 %2218
    %2222 = vrot.lane.b32.xlu0 %v842, 20
    %v2223 = vpop.permute.xlu0 %2222
    %2226 = vrot.lane.b32.xlu0 %v836, 24
    %v2227 = vpop.permute.xlu0 %2226
    %2230 = vrot.lane.b32.xlu0 %v844, 28
    %v2231 = vpop.permute.xlu0 %2230
    %2234 = vrot.lane.b32.xlu0 %v872, 32
    %v2235 = vpop.permute.xlu0 %2234
    %2238 = vrot.lane.b32.xlu0 %v890, 36
    %v2239 = vpop.permute.xlu0 %2238
    %2242 = vrot.lane.b32.xlu0 %v876, 40
    %v2243 = vpop.permute.xlu0 %2242
    %2246 = vrot.lane.b32.xlu0 %v892, 44
    %v2247 = vpop.permute.xlu0 %2246
    %2250 = vrot.lane.b32.xlu0 %v884, 48
    %v2251 = vpop.permute.xlu0 %2250
    %2254 = vrot.lane.b32.xlu0 %v894, 52
    %v2255 = vpop.permute.xlu0 %2254
    %2258 = vrot.lane.b32.xlu0 %v888, 56
    %v2259 = vpop.permute.xlu0 %2258
    %2262 = vrot.lane.b32.xlu0 %v896, 60
    %v2263 = vpop.permute.xlu0 %2262
    %2266 = vrot.lane.b32.xlu0 %v924, 64
    %v2267 = vpop.permute.xlu0 %2266
    %2270 = vrot.lane.b32.xlu0 %v942, 68
    %v2271 = vpop.permute.xlu0 %2270
    %2274 = vrot.lane.b32.xlu0 %v928, 72
    %v2275 = vpop.permute.xlu0 %2274
    %2278 = vrot.lane.b32.xlu0 %v944, 76
    %v2279 = vpop.permute.xlu0 %2278
    %2282 = vrot.lane.b32.xlu0 %v936, 80
    %v2283 = vpop.permute.xlu0 %2282
    %2286 = vrot.lane.b32.xlu0 %v946, 84
    %v2287 = vpop.permute.xlu0 %2286
    %2290 = vrot.lane.b32.xlu0 %v940, 88
    %v2291 = vpop.permute.xlu0 %2290
    %2294 = vrot.lane.b32.xlu0 %v948, 92
    %v2295 = vpop.permute.xlu0 %2294
    %2298 = vrot.lane.b32.xlu0 %v976, 96
    %v2299 = vpop.permute.xlu0 %2298
    %2302 = vrot.lane.b32.xlu0 %v994, 100
    %v2303 = vpop.permute.xlu0 %2302
    %2306 = vrot.lane.b32.xlu0 %v980, 104
    %v2307 = vpop.permute.xlu0 %2306
    %2310 = vrot.lane.b32.xlu0 %v996, 108
    %v2311 = vpop.permute.xlu0 %2310
    %2314 = vrot.lane.b32.xlu0 %v988, 112
    %v2315 = vpop.permute.xlu0 %2314
    %2318 = vrot.lane.b32.xlu0 %v998, 116
    %v2319 = vpop.permute.xlu0 %2318
    %2322 = vrot.lane.b32.xlu0 %v992, 120
    %v2323 = vpop.permute.xlu0 %2322
    %2326 = vrot.lane.b32.xlu0 %v1000, 124
    %v2327 = vpop.permute.xlu0 %2326
    %2330 = vrot.lane.b32.xlu0 %v1046, 4
    %v2331 = vpop.permute.xlu0 %2330
    %2334 = vrot.lane.b32.xlu0 %v1032, 8
    %v2335 = vpop.permute.xlu0 %2334
    %2338 = vrot.lane.b32.xlu0 %v1048, 12
    %v2339 = vpop.permute.xlu0 %2338
    %2342 = vrot.lane.b32.xlu0 %v1040, 16
    %v2343 = vpop.permute.xlu0 %2342
    %2346 = vrot.lane.b32.xlu0 %v1050, 20
    %v2347 = vpop.permute.xlu0 %2346
    %2350 = vrot.lane.b32.xlu0 %v1044, 24
    %v2351 = vpop.permute.xlu0 %2350
    %2354 = vrot.lane.b32.xlu0 %v1052, 28
    %v2355 = vpop.permute.xlu0 %2354
    %2358 = vrot.lane.b32.xlu0 %v1080, 32
    %v2359 = vpop.permute.xlu0 %2358
    %2362 = vrot.lane.b32.xlu0 %v1098, 36
    %v2363 = vpop.permute.xlu0 %2362
    %2366 = vrot.lane.b32.xlu0 %v1084, 40
    %v2367 = vpop.permute.xlu0 %2366
    %2370 = vrot.lane.b32.xlu0 %v1100, 44
    %v2371 = vpop.permute.xlu0 %2370
    %2374 = vrot.lane.b32.xlu0 %v1092, 48
    %v2375 = vpop.permute.xlu0 %2374
    %2378 = vrot.lane.b32.xlu0 %v1102, 52
    %v2379 = vpop.permute.xlu0 %2378
    %2382 = vrot.lane.b32.xlu0 %v1096, 56
    %v2383 = vpop.permute.xlu0 %2382
    %2386 = vrot.lane.b32.xlu0 %v1104, 60
    %v2387 = vpop.permute.xlu0 %2386
    %2390 = vrot.lane.b32.xlu0 %v1132, 64
    %v2391 = vpop.permute.xlu0 %2390
    %2394 = vrot.lane.b32.xlu0 %v1150, 68
    %v2395 = vpop.permute.xlu0 %2394
    %2398 = vrot.lane.b32.xlu0 %v1136, 72
    %v2399 = vpop.permute.xlu0 %2398
    %2402 = vrot.lane.b32.xlu0 %v1152, 76
    %v2403 = vpop.permute.xlu0 %2402
    %2406 = vrot.lane.b32.xlu0 %v1144, 80
    %v2407 = vpop.permute.xlu0 %2406
    %2410 = vrot.lane.b32.xlu0 %v1154, 84
    %v2411 = vpop.permute.xlu0 %2410
    %2414 = vrot.lane.b32.xlu0 %v1148, 88
    %v2415 = vpop.permute.xlu0 %2414
    %2418 = vrot.lane.b32.xlu0 %v1156, 92
    %v2419 = vpop.permute.xlu0 %2418
    %2422 = vrot.lane.b32.xlu0 %v1184, 96
    %v2423 = vpop.permute.xlu0 %2422
    %2426 = vrot.lane.b32.xlu0 %v1202, 100
    %v2427 = vpop.permute.xlu0 %2426
    %2430 = vrot.lane.b32.xlu0 %v1188, 104
    %v2431 = vpop.permute.xlu0 %2430
    %2434 = vrot.lane.b32.xlu0 %v1204, 108
    %v2435 = vpop.permute.xlu0 %2434
    %2438 = vrot.lane.b32.xlu0 %v1196, 112
    %v2439 = vpop.permute.xlu0 %2438
    %2442 = vrot.lane.b32.xlu0 %v1206, 116
    %v2443 = vpop.permute.xlu0 %2442
    %2446 = vrot.lane.b32.xlu0 %v1200, 120
    %v2447 = vpop.permute.xlu0 %2446
    %2450 = vrot.lane.b32.xlu0 %v1208, 124
    %v2451 = vpop.permute.xlu0 %2450
    %2454 = vrot.lane.b32.xlu0 %v1254, 4
    %v2455 = vpop.permute.xlu0 %2454
    %2458 = vrot.lane.b32.xlu0 %v1240, 8
    %v2459 = vpop.permute.xlu0 %2458
    %2462 = vrot.lane.b32.xlu0 %v1256, 12
    %v2463 = vpop.permute.xlu0 %2462
    %2466 = vrot.lane.b32.xlu0 %v1248, 16
    %v2467 = vpop.permute.xlu0 %2466
    %2470 = vrot.lane.b32.xlu0 %v1258, 20
    %v2471 = vpop.permute.xlu0 %2470
    %2474 = vrot.lane.b32.xlu0 %v1252, 24
    %v2475 = vpop.permute.xlu0 %2474
    %2478 = vrot.lane.b32.xlu0 %v1260, 28
    %v2479 = vpop.permute.xlu0 %2478
    %2482 = vrot.lane.b32.xlu0 %v1288, 32
    %v2483 = vpop.permute.xlu0 %2482
    %2486 = vrot.lane.b32.xlu0 %v1306, 36
    %v2487 = vpop.permute.xlu0 %2486
    %2490 = vrot.lane.b32.xlu0 %v1292, 40
    %v2491 = vpop.permute.xlu0 %2490
    %2494 = vrot.lane.b32.xlu0 %v1308, 44
    %v2495 = vpop.permute.xlu0 %2494
    %2498 = vrot.lane.b32.xlu0 %v1300, 48
    %v2499 = vpop.permute.xlu0 %2498
    %2502 = vrot.lane.b32.xlu0 %v1310, 52
    %v2503 = vpop.permute.xlu0 %2502
    %2506 = vrot.lane.b32.xlu0 %v1304, 56
    %v2507 = vpop.permute.xlu0 %2506
    %2510 = vrot.lane.b32.xlu0 %v1312, 60
    %v2511 = vpop.permute.xlu0 %2510
    %2514 = vrot.lane.b32.xlu0 %v1340, 64
    %v2515 = vpop.permute.xlu0 %2514
    %2518 = vrot.lane.b32.xlu0 %v1358, 68
    %v2519 = vpop.permute.xlu0 %2518
    %2522 = vrot.lane.b32.xlu0 %v1344, 72
    %v2523 = vpop.permute.xlu0 %2522
    %2526 = vrot.lane.b32.xlu0 %v1360, 76
    %v2527 = vpop.permute.xlu0 %2526
    %2530 = vrot.lane.b32.xlu0 %v1352, 80
    %v2531 = vpop.permute.xlu0 %2530
    %2534 = vrot.lane.b32.xlu0 %v1362, 84
    %v2535 = vpop.permute.xlu0 %2534
    %2538 = vrot.lane.b32.xlu0 %v1356, 88
    %v2539 = vpop.permute.xlu0 %2538
    %2542 = vrot.lane.b32.xlu0 %v1364, 92
    %v2543 = vpop.permute.xlu0 %2542
    %2546 = vrot.lane.b32.xlu0 %v1392, 96
    %v2547 = vpop.permute.xlu0 %2546
    %2550 = vrot.lane.b32.xlu0 %v1410, 100
    %v2551 = vpop.permute.xlu0 %2550
    %2554 = vrot.lane.b32.xlu0 %v1396, 104
    %v2555 = vpop.permute.xlu0 %2554
    %2558 = vrot.lane.b32.xlu0 %v1412, 108
    %v2559 = vpop.permute.xlu0 %2558
    %2562 = vrot.lane.b32.xlu0 %v1404, 112
    %v2563 = vpop.permute.xlu0 %2562
    %2566 = vrot.lane.b32.xlu0 %v1414, 116
    %v2567 = vpop.permute.xlu0 %2566
    %2570 = vrot.lane.b32.xlu0 %v1408, 120
    %v2571 = vpop.permute.xlu0 %2570
    %2574 = vrot.lane.b32.xlu0 %v1416, 124
    %v2575 = vpop.permute.xlu0 %2574
    %2578 = vrot.lane.b32.xlu0 %v1462, 4
    %v2579 = vpop.permute.xlu0 %2578
    %2582 = vrot.lane.b32.xlu0 %v1448, 8
    %v2583 = vpop.permute.xlu0 %2582
    %2586 = vrot.lane.b32.xlu0 %v1464, 12
    %v2587 = vpop.permute.xlu0 %2586
    %2590 = vrot.lane.b32.xlu0 %v1456, 16
    %v2591 = vpop.permute.xlu0 %2590
    %2594 = vrot.lane.b32.xlu0 %v1466, 20
    %v2595 = vpop.permute.xlu0 %2594
    %2598 = vrot.lane.b32.xlu0 %v1460, 24
    %v2599 = vpop.permute.xlu0 %2598
    %2602 = vrot.lane.b32.xlu0 %v1468, 28
    %v2603 = vpop.permute.xlu0 %2602
    %2606 = vrot.lane.b32.xlu0 %v1496, 32
    %v2607 = vpop.permute.xlu0 %2606
    %2610 = vrot.lane.b32.xlu0 %v1514, 36
    %v2611 = vpop.permute.xlu0 %2610
    %2614 = vrot.lane.b32.xlu0 %v1500, 40
    %v2615 = vpop.permute.xlu0 %2614
    %2618 = vrot.lane.b32.xlu0 %v1516, 44
    %v2619 = vpop.permute.xlu0 %2618
    %2622 = vrot.lane.b32.xlu0 %v1508, 48
    %v2623 = vpop.permute.xlu0 %2622
    %2626 = vrot.lane.b32.xlu0 %v1518, 52
    %v2627 = vpop.permute.xlu0 %2626
    %2630 = vrot.lane.b32.xlu0 %v1512, 56
    %v2631 = vpop.permute.xlu0 %2630
    %2634 = vrot.lane.b32.xlu0 %v1520, 60
    %v2635 = vpop.permute.xlu0 %2634
    %2638 = vrot.lane.b32.xlu0 %v1548, 64
    %v2639 = vpop.permute.xlu0 %2638
    %2642 = vrot.lane.b32.xlu0 %v1566, 68
    %v2643 = vpop.permute.xlu0 %2642
    %2646 = vrot.lane.b32.xlu0 %v1552, 72
    %v2647 = vpop.permute.xlu0 %2646
    %2650 = vrot.lane.b32.xlu0 %v1568, 76
    %v2651 = vpop.permute.xlu0 %2650
    %2654 = vrot.lane.b32.xlu0 %v1560, 80
    %v2655 = vpop.permute.xlu0 %2654
    %2658 = vrot.lane.b32.xlu0 %v1570, 84
    %v2659 = vpop.permute.xlu0 %2658
    %2662 = vrot.lane.b32.xlu0 %v1564, 88
    %v2663 = vpop.permute.xlu0 %2662
    %2666 = vrot.lane.b32.xlu0 %v1572, 92
    %v2667 = vpop.permute.xlu0 %2666
    %2670 = vrot.lane.b32.xlu0 %v1600, 96
    %v2671 = vpop.permute.xlu0 %2670
    %2674 = vrot.lane.b32.xlu0 %v1618, 100
    %v2675 = vpop.permute.xlu0 %2674
    %2678 = vrot.lane.b32.xlu0 %v1604, 104
    %v2679 = vpop.permute.xlu0 %2678
    %2682 = vrot.lane.b32.xlu0 %v1620, 108
    %v2683 = vpop.permute.xlu0 %2682
    %2686 = vrot.lane.b32.xlu0 %v1612, 112
    %v2687 = vpop.permute.xlu0 %2686
    %2690 = vrot.lane.b32.xlu0 %v1622, 116
    %v2691 = vpop.permute.xlu0 %2690
    %2694 = vrot.lane.b32.xlu0 %v1616, 120
    %v2695 = vpop.permute.xlu0 %2694
    %2698 = vrot.lane.b32.xlu0 %v1624, 124
    %v2699 = vpop.permute.xlu0 %2698
    %2702 = vrot.lane.b32.xlu0 %v1670, 4
    %v2703 = vpop.permute.xlu0 %2702
    %2706 = vrot.lane.b32.xlu0 %v1656, 8
    %v2707 = vpop.permute.xlu0 %2706
    %2710 = vrot.lane.b32.xlu0 %v1672, 12
    %v2711 = vpop.permute.xlu0 %2710
    %2714 = vrot.lane.b32.xlu0 %v1664, 16
    %v2715 = vpop.permute.xlu0 %2714
    %2718 = vrot.lane.b32.xlu0 %v1674, 20
    %v2719 = vpop.permute.xlu0 %2718
    %2722 = vrot.lane.b32.xlu0 %v1668, 24
    %v2723 = vpop.permute.xlu0 %2722
    %2726 = vrot.lane.b32.xlu0 %v1676, 28
    %v2727 = vpop.permute.xlu0 %2726
    %2730 = vrot.lane.b32.xlu0 %v1704, 32
    %v2731 = vpop.permute.xlu0 %2730
    %2734 = vrot.lane.b32.xlu0 %v1722, 36
    %v2735 = vpop.permute.xlu0 %2734
    %2738 = vrot.lane.b32.xlu0 %v1708, 40
    %v2739 = vpop.permute.xlu0 %2738
    %2742 = vrot.lane.b32.xlu0 %v1724, 44
    %v2743 = vpop.permute.xlu0 %2742
    %2746 = vrot.lane.b32.xlu0 %v1716, 48
    %v2747 = vpop.permute.xlu0 %2746
    %2750 = vrot.lane.b32.xlu0 %v1726, 52
    %v2751 = vpop.permute.xlu0 %2750
    %2754 = vrot.lane.b32.xlu0 %v1720, 56
    %v2755 = vpop.permute.xlu0 %2754
    %2758 = vrot.lane.b32.xlu0 %v1728, 60
    %v2759 = vpop.permute.xlu0 %2758
    %2762 = vrot.lane.b32.xlu0 %v1756, 64
    %v2763 = vpop.permute.xlu0 %2762
    %2766 = vrot.lane.b32.xlu0 %v1774, 68
    %v2767 = vpop.permute.xlu0 %2766
    %2770 = vrot.lane.b32.xlu0 %v1760, 72
    %v2771 = vpop.permute.xlu0 %2770
    %2774 = vrot.lane.b32.xlu0 %v1776, 76
    %v2775 = vpop.permute.xlu0 %2774
    %2778 = vrot.lane.b32.xlu0 %v1768, 80
    %v2779 = vpop.permute.xlu0 %2778
    %2782 = vrot.lane.b32.xlu0 %v1778, 84
    %v2783 = vpop.permute.xlu0 %2782
    %2786 = vrot.lane.b32.xlu0 %v1772, 88
    %v2787 = vpop.permute.xlu0 %2786
    %2790 = vrot.lane.b32.xlu0 %v1780, 92
    %v2791 = vpop.permute.xlu0 %2790
    %2794 = vrot.lane.b32.xlu0 %v1808, 96
    %v2795 = vpop.permute.xlu0 %2794
    %2798 = vrot.lane.b32.xlu0 %v1826, 100
    %v2799 = vpop.permute.xlu0 %2798
    %2802 = vrot.lane.b32.xlu0 %v1812, 104
    %v2803 = vpop.permute.xlu0 %2802
    %2806 = vrot.lane.b32.xlu0 %v1828, 108
    %v2807 = vpop.permute.xlu0 %2806
    %2810 = vrot.lane.b32.xlu0 %v1820, 112
    %v2811 = vpop.permute.xlu0 %2810
    %2814 = vrot.lane.b32.xlu0 %v1830, 116
    %v2815 = vpop.permute.xlu0 %2814
    %2818 = vrot.lane.b32.xlu0 %v1824, 120
    %v2819 = vpop.permute.xlu0 %2818
    %2822 = vrot.lane.b32.xlu0 %v1832, 124
    %v2823 = vpop.permute.xlu0 %2822
    %vm2825 = vcmask 31744
    %v2826 = vsel %vm2825, %v196, %v1835
    %vm2827 = vcmask 64512
    %v2828 = vsel %vm2827, %v2826, %v1839
    %vm2829 = vcmask 97280
    %v2830 = vsel %vm2829, %v2828, %v1843
    %vm2831 = vcmask 130048
    %v2832 = vsel %vm2831, %v2830, %v1847
    %vm2833 = vcmask 162816
    %v2834 = vsel %vm2833, %v2832, %v1851
    %vm2835 = vcmask 195584
    %v2836 = vsel %vm2835, %v2834, %v1855
    %vm2837 = vcmask 228352
    %v2838 = vsel %vm2837, %v2836, %v1859
    %vm2839 = vcmask 261120
    %v2840 = vsel %vm2839, %v2838, %v1863
    %vm2841 = vcmask 293888
    %v2842 = vsel %vm2841, %v2840, %v1867
    %vm2843 = vcmask 326656
    %v2844 = vsel %vm2843, %v2842, %v1871
    %vm2845 = vcmask 359424
    %v2846 = vsel %vm2845, %v2844, %v1875
    %vm2847 = vcmask 392192
    %v2848 = vsel %vm2847, %v2846, %v1879
    %vm2849 = vcmask 424960
    %v2850 = vsel %vm2849, %v2848, %v1883
    %vm2851 = vcmask 457728
    %v2852 = vsel %vm2851, %v2850, %v1887
    %vm2853 = vcmask 490496
    %v2854 = vsel %vm2853, %v2852, %v1891
    %vm2855 = vcmask 523264
    %v2856 = vsel %vm2855, %v2854, %v1895
    %vm2857 = vcmask 556032
    %v2858 = vsel %vm2857, %v2856, %v1899
    %vm2859 = vcmask 588800
    %v2860 = vsel %vm2859, %v2858, %v1903
    %vm2861 = vcmask 621568
    %v2862 = vsel %vm2861, %v2860, %v1907
    %vm2863 = vcmask 654336
    %v2864 = vsel %vm2863, %v2862, %v1911
    %vm2865 = vcmask 687104
    %v2866 = vsel %vm2865, %v2864, %v1915
    %vm2867 = vcmask 719872
    %v2868 = vsel %vm2867, %v2866, %v1919
    %vm2869 = vcmask 752640
    %v2870 = vsel %vm2869, %v2868, %v1923
    %vm2871 = vcmask 785408
    %v2872 = vsel %vm2871, %v2870, %v1927
    %vm2873 = vcmask 818176
    %v2874 = vsel %vm2873, %v2872, %v1931
    %vm2875 = vcmask 850944
    %v2876 = vsel %vm2875, %v2874, %v1935
    %vm2877 = vcmask 883712
    %v2878 = vsel %vm2877, %v2876, %v1939
    %vm2879 = vcmask 916480
    %v2880 = vsel %vm2879, %v2878, %v1943
    %vm2881 = vcmask 949248
    %v2882 = vsel %vm2881, %v2880, %v1947
    %vm2883 = vcmask 982016
    %v2884 = vsel %vm2883, %v2882, %v1951
    %vm2885 = vcmask 1014784
    %v2886 = vsel %vm2885, %v2884, %v1955
    %v2887 = vsel %vm2825, %v404, %v1959
    %v2888 = vsel %vm2827, %v2887, %v1963
    %v2889 = vsel %vm2829, %v2888, %v1967
    %v2890 = vsel %vm2831, %v2889, %v1971
    %v2891 = vsel %vm2833, %v2890, %v1975
    %v2892 = vsel %vm2835, %v2891, %v1979
    %v2893 = vsel %vm2837, %v2892, %v1983
    %v2894 = vsel %vm2839, %v2893, %v1987
    %v2895 = vsel %vm2841, %v2894, %v1991
    %v2896 = vsel %vm2843, %v2895, %v1995
    %v2897 = vsel %vm2845, %v2896, %v1999
    %v2898 = vsel %vm2847, %v2897, %v2003
    %v2899 = vsel %vm2849, %v2898, %v2007
    %v2900 = vsel %vm2851, %v2899, %v2011
    %v2901 = vsel %vm2853, %v2900, %v2015
    %v2902 = vsel %vm2855, %v2901, %v2019
    %v2903 = vsel %vm2857, %v2902, %v2023
    %v2904 = vsel %vm2859, %v2903, %v2027
    %v2905 = vsel %vm2861, %v2904, %v2031
    %v2906 = vsel %vm2863, %v2905, %v2035
    %v2907 = vsel %vm2865, %v2906, %v2039
    %v2908 = vsel %vm2867, %v2907, %v2043
    %v2909 = vsel %vm2869, %v2908, %v2047
    %v2910 = vsel %vm2871, %v2909, %v2051
    %v2911 = vsel %vm2873, %v2910, %v2055
    %v2912 = vsel %vm2875, %v2911, %v2059
    %v2913 = vsel %vm2877, %v2912, %v2063
    %v2914 = vsel %vm2879, %v2913, %v2067
    %v2915 = vsel %vm2881, %v2914, %v2071
    %v2916 = vsel %vm2883, %v2915, %v2075
    %v2917 = vsel %vm2885, %v2916, %v2079
    %v2918 = vsel %vm2825, %v612, %v2083
    %v2919 = vsel %vm2827, %v2918, %v2087
    %v2920 = vsel %vm2829, %v2919, %v2091
    %v2921 = vsel %vm2831, %v2920, %v2095
    %v2922 = vsel %vm2833, %v2921, %v2099
    %v2923 = vsel %vm2835, %v2922, %v2103
    %v2924 = vsel %vm2837, %v2923, %v2107
    %v2925 = vsel %vm2839, %v2924, %v2111
    %v2926 = vsel %vm2841, %v2925, %v2115
    %v2927 = vsel %vm2843, %v2926, %v2119
    %v2928 = vsel %vm2845, %v2927, %v2123
    %v2929 = vsel %vm2847, %v2928, %v2127
    %v2930 = vsel %vm2849, %v2929, %v2131
    %v2931 = vsel %vm2851, %v2930, %v2135
    %v2932 = vsel %vm2853, %v2931, %v2139
    %v2933 = vsel %vm2855, %v2932, %v2143
    %v2934 = vsel %vm2857, %v2933, %v2147
    %v2935 = vsel %vm2859, %v2934, %v2151
    %v2936 = vsel %vm2861, %v2935, %v2155
    %v2937 = vsel %vm2863, %v2936, %v2159
    %v2938 = vsel %vm2865, %v2937, %v2163
    %v2939 = vsel %vm2867, %v2938, %v2167
    %v2940 = vsel %vm2869, %v2939, %v2171
    %v2941 = vsel %vm2871, %v2940, %v2175
    %v2942 = vsel %vm2873, %v2941, %v2179
    %v2943 = vsel %vm2875, %v2942, %v2183
    %v2944 = vsel %vm2877, %v2943, %v2187
    %v2945 = vsel %vm2879, %v2944, %v2191
    %v2946 = vsel %vm2881, %v2945, %v2195
    %v2947 = vsel %vm2883, %v2946, %v2199
    %v2948 = vsel %vm2885, %v2947, %v2203
    %v2949 = vsel %vm2825, %v820, %v2207
    %v2950 = vsel %vm2827, %v2949, %v2211
    %v2951 = vsel %vm2829, %v2950, %v2215
    %v2952 = vsel %vm2831, %v2951, %v2219
    %v2953 = vsel %vm2833, %v2952, %v2223
    %v2954 = vsel %vm2835, %v2953, %v2227
    %v2955 = vsel %vm2837, %v2954, %v2231
    %v2956 = vsel %vm2839, %v2955, %v2235
    %v2957 = vsel %vm2841, %v2956, %v2239
    %v2958 = vsel %vm2843, %v2957, %v2243
    %v2959 = vsel %vm2845, %v2958, %v2247
    %v2960 = vsel %vm2847, %v2959, %v2251
    %v2961 = vsel %vm2849, %v2960, %v2255
    %v2962 = vsel %vm2851, %v2961, %v2259
    %v2963 = vsel %vm2853, %v2962, %v2263
    %v2964 = vsel %vm2855, %v2963, %v2267
    %v2965 = vsel %vm2857, %v2964, %v2271
    %v2966 = vsel %vm2859, %v2965, %v2275
    %v2967 = vsel %vm2861, %v2966, %v2279
    %v2968 = vsel %vm2863, %v2967, %v2283
    %v2969 = vsel %vm2865, %v2968, %v2287
    %v2970 = vsel %vm2867, %v2969, %v2291
    %v2971 = vsel %vm2869, %v2970, %v2295
    %v2972 = vsel %vm2871, %v2971, %v2299
    %v2973 = vsel %vm2873, %v2972, %v2303
    %v2974 = vsel %vm2875, %v2973, %v2307
    %v2975 = vsel %vm2877, %v2974, %v2311
    %v2976 = vsel %vm2879, %v2975, %v2315
    %v2977 = vsel %vm2881, %v2976, %v2319
    %v2978 = vsel %vm2883, %v2977, %v2323
    %v2979 = vsel %vm2885, %v2978, %v2327
    %v2980 = vsel %vm2825, %v1028, %v2331
    %v2981 = vsel %vm2827, %v2980, %v2335
    %v2982 = vsel %vm2829, %v2981, %v2339
    %v2983 = vsel %vm2831, %v2982, %v2343
    %v2984 = vsel %vm2833, %v2983, %v2347
    %v2985 = vsel %vm2835, %v2984, %v2351
    %v2986 = vsel %vm2837, %v2985, %v2355
    %v2987 = vsel %vm2839, %v2986, %v2359
    %v2988 = vsel %vm2841, %v2987, %v2363
    %v2989 = vsel %vm2843, %v2988, %v2367
    %v2990 = vsel %vm2845, %v2989, %v2371
    %v2991 = vsel %vm2847, %v2990, %v2375
    %v2992 = vsel %vm2849, %v2991, %v2379
    %v2993 = vsel %vm2851, %v2992, %v2383
    %v2994 = vsel %vm2853, %v2993, %v2387
    %v2995 = vsel %vm2855, %v2994, %v2391
    %v2996 = vsel %vm2857, %v2995, %v2395
    %v2997 = vsel %vm2859, %v2996, %v2399
    %v2998 = vsel %vm2861, %v2997, %v2403
    %v2999 = vsel %vm2863, %v2998, %v2407
    %v3000 = vsel %vm2865, %v2999, %v2411
    %v3001 = vsel %vm2867, %v3000, %v2415
    %v3002 = vsel %vm2869, %v3001, %v2419
    %v3003 = vsel %vm2871, %v3002, %v2423
    %v3004 = vsel %vm2873, %v3003, %v2427
    %v3005 = vsel %vm2875, %v3004, %v2431
    %v3006 = vsel %vm2877, %v3005, %v2435
    %v3007 = vsel %vm2879, %v3006, %v2439
    %v3008 = vsel %vm2881, %v3007, %v2443
    %v3009 = vsel %vm2883, %v3008, %v2447
    %v3010 = vsel %vm2885, %v3009, %v2451
    %v3011 = vsel %vm2825, %v1236, %v2455
    %v3012 = vsel %vm2827, %v3011, %v2459
    %v3013 = vsel %vm2829, %v3012, %v2463
    %v3014 = vsel %vm2831, %v3013, %v2467
    %v3015 = vsel %vm2833, %v3014, %v2471
    %v3016 = vsel %vm2835, %v3015, %v2475
    %v3017 = vsel %vm2837, %v3016, %v2479
    %v3018 = vsel %vm2839, %v3017, %v2483
    %v3019 = vsel %vm2841, %v3018, %v2487
    %v3020 = vsel %vm2843, %v3019, %v2491
    %v3021 = vsel %vm2845, %v3020, %v2495
    %v3022 = vsel %vm2847, %v3021, %v2499
    %v3023 = vsel %vm2849, %v3022, %v2503
    %v3024 = vsel %vm2851, %v3023, %v2507
    %v3025 = vsel %vm2853, %v3024, %v2511
    %v3026 = vsel %vm2855, %v3025, %v2515
    %v3027 = vsel %vm2857, %v3026, %v2519
    %v3028 = vsel %vm2859, %v3027, %v2523
    %v3029 = vsel %vm2861, %v3028, %v2527
    %v3030 = vsel %vm2863, %v3029, %v2531
    %v3031 = vsel %vm2865, %v3030, %v2535
    %v3032 = vsel %vm2867, %v3031, %v2539
    %v3033 = vsel %vm2869, %v3032, %v2543
    %v3034 = vsel %vm2871, %v3033, %v2547
    %v3035 = vsel %vm2873, %v3034, %v2551
    %v3036 = vsel %vm2875, %v3035, %v2555
    %v3037 = vsel %vm2877, %v3036, %v2559
    %v3038 = vsel %vm2879, %v3037, %v2563
    %v3039 = vsel %vm2881, %v3038, %v2567
    %v3040 = vsel %vm2883, %v3039, %v2571
    %v3041 = vsel %vm2885, %v3040, %v2575
    %v3042 = vsel %vm2825, %v1444, %v2579
    %v3043 = vsel %vm2827, %v3042, %v2583
    %v3044 = vsel %vm2829, %v3043, %v2587
    %v3045 = vsel %vm2831, %v3044, %v2591
    %v3046 = vsel %vm2833, %v3045, %v2595
    %v3047 = vsel %vm2835, %v3046, %v2599
    %v3048 = vsel %vm2837, %v3047, %v2603
    %v3049 = vsel %vm2839, %v3048, %v2607
    %v3050 = vsel %vm2841, %v3049, %v2611
    %v3051 = vsel %vm2843, %v3050, %v2615
    %v3052 = vsel %vm2845, %v3051, %v2619
    %v3053 = vsel %vm2847, %v3052, %v2623
    %v3054 = vsel %vm2849, %v3053, %v2627
    %v3055 = vsel %vm2851, %v3054, %v2631
    %v3056 = vsel %vm2853, %v3055, %v2635
    %v3057 = vsel %vm2855, %v3056, %v2639
    %v3058 = vsel %vm2857, %v3057, %v2643
    %v3059 = vsel %vm2859, %v3058, %v2647
    %v3060 = vsel %vm2861, %v3059, %v2651
    %v3061 = vsel %vm2863, %v3060, %v2655
    %v3062 = vsel %vm2865, %v3061, %v2659
    %v3063 = vsel %vm2867, %v3062, %v2663
    %v3064 = vsel %vm2869, %v3063, %v2667
    %v3065 = vsel %vm2871, %v3064, %v2671
    %v3066 = vsel %vm2873, %v3065, %v2675
    %v3067 = vsel %vm2875, %v3066, %v2679
    %v3068 = vsel %vm2877, %v3067, %v2683
    %v3069 = vsel %vm2879, %v3068, %v2687
    %v3070 = vsel %vm2881, %v3069, %v2691
    %v3071 = vsel %vm2883, %v3070, %v2695
    %v3072 = vsel %vm2885, %v3071, %v2699
    %v3073 = vsel %vm2825, %v1652, %v2703
    %v3074 = vsel %vm2827, %v3073, %v2707
    %v3075 = vsel %vm2829, %v3074, %v2711
    %v3076 = vsel %vm2831, %v3075, %v2715
    %v3077 = vsel %vm2833, %v3076, %v2719
    %v3078 = vsel %vm2835, %v3077, %v2723
    %v3079 = vsel %vm2837, %v3078, %v2727
    %v3080 = vsel %vm2839, %v3079, %v2731
    %v3081 = vsel %vm2841, %v3080, %v2735
    %v3082 = vsel %vm2843, %v3081, %v2739
    %v3083 = vsel %vm2845, %v3082, %v2743
    %v3084 = vsel %vm2847, %v3083, %v2747
    %v3085 = vsel %vm2849, %v3084, %v2751
    %v3086 = vsel %vm2851, %v3085, %v2755
    %v3087 = vsel %vm2853, %v3086, %v2759
    %v3088 = vsel %vm2855, %v3087, %v2763
    %v3089 = vsel %vm2857, %v3088, %v2767
    %v3090 = vsel %vm2859, %v3089, %v2771
    %v3091 = vsel %vm2861, %v3090, %v2775
    %v3092 = vsel %vm2863, %v3091, %v2779
    %v3093 = vsel %vm2865, %v3092, %v2783
    %v3094 = vsel %vm2867, %v3093, %v2787
    %v3095 = vsel %vm2869, %v3094, %v2791
    %v3096 = vsel %vm2871, %v3095, %v2795
    %v3097 = vsel %vm2873, %v3096, %v2799
    %v3098 = vsel %vm2875, %v3097, %v2803
    %v3099 = vsel %vm2877, %v3098, %v2807
    %v3100 = vsel %vm2879, %v3099, %v2811
    %v3101 = vsel %vm2881, %v3100, %v2815
    %v3102 = vsel %vm2883, %v3101, %v2819
    %v3103 = vsel %vm2885, %v3102, %v2823
    %v3112 = vrot.slane %v2917, 6
    %v3113 = vrot.slane %v2948, 4
    %v3114 = vrot.slane %v2979, 2
    %v3115 = vrot.slane %v3041, 6
    %v3116 = vrot.slane %v3072, 4
    %v3117 = vrot.slane %v3103, 2
    %vm3118 = vcmask 1041408
    %v3119 = vsel %vm3118, %v2886, %v3112
    %vm3120 = vcmask 1045508
    %v3121 = vsel %vm3120, %v3113, %v3114
    %vm3122 = vcmask 1043456
    %v3123 = vsel %vm3122, %v3119, %v3121
    %v3124 = vsel %vm3118, %v3010, %v3115
    %v3125 = vsel %vm3120, %v3116, %v3117
    %v3126 = vsel %vm3122, %v3124, %v3125
    %3129 = vst [vmem:[#allocation5] sm:$0xff] %v3123
    %3130 = vst [vmem:[#allocation5 + $0x8] sm:$0xff] %v3126
    // Predicated region
    $region10: #{tpu_custom_call.1} parent=1 // pred_check
      _
    $region11: #{tpu_custom_call.1} parent=1 // pred_check_branch
      %3132 = sbr.rel (0) target = $region13
    $region12: #{tpu_custom_call.1} parent=1 // pred_region
      %3134 = vsyncadd [#allocation4], 0
      %s3136 = sshll.u32 [#allocation5], 4
      %s3137 = int_to_ptr.vmem [resolvable:$true] %s3136
      %s3138 = sshll.u32 %s1, 4
      %s3139 = int_to_ptr.hbm [resolvable:$true] %s3138
      %3141 = dma.vmem_to_hbm [thread:$0]  %s3137, 256, %s3139, [#allocation4]
    $region13: #{tpu_custom_call.1} parent=1 // pred_fallthru
      _
    // Predicated region
    $region14: #{tpu_custom_call.1} parent=1 // pred_check
      _
    $region15: #{tpu_custom_call.1} parent=1 // pred_check_branch
      %3143 = sbr.rel (0) target = $region17
    $region16: #{tpu_custom_call.1} parent=1 // pred_region
      %3145 = dma.done [#allocation4], 256
    $region17: #{tpu_custom_call.1} parent=1 // pred_fallthru
      _
    %3146 = vsyncpa [#allocation3], 1
    %3147 = vsyncpa [#allocation4], 1

</llo_original>
